<compile_context>
chip_gen: v6e
topology: v6e:2x2x1
jax: 0.10.0
libtpu: 0.0.40
codegen_flags: <defaults>
</compile_context>

<pallas_src>
import jax
import jax.numpy as jnp
from jax import lax
from jax.experimental import pallas as pl
from jax.experimental.pallas import tpu as pltpu

EPS = 1e-5  # torch BatchNorm2d / LayerNorm default


def prepare_params(w1, ln_w, ln_b, w2, b2):
    """One-time weight / affine re-layout (hoisted out of the per-step forward path).

    w1, w2: (C, C, K, K) PyTorch OIHW.  ln_w/ln_b: (C, H, W).  b2: (C,).
    Returns device arrays laid out for the lane-folded (H, W*C) kernel.
    """
    f32 = jnp.float32
    C, _, K, _ = w1.shape
    _, H, W = ln_w.shape
    WC = W * C

    # Per-tap block-diagonal weights: fold W into the matmul N dim (lane-dense matmuls).
    def blockdiag_taps(wt):                                       # wt: (Co, Ci, K, K)
        eye = jnp.eye(W, dtype=f32)
        taps = [jnp.kron(eye, wt[:, :, kh, kw].T.astype(f32))
                for kh in range(K) for kw in range(K)]
        return jnp.stack(taps, 0)                                 # (K*K, W*Ci, W*Co)

    ln2d = jnp.stack(
        [jnp.transpose(ln_w.astype(f32), (1, 2, 0)).reshape(H, WC),
         jnp.transpose(ln_b.astype(f32), (1, 2, 0)).reshape(H, WC)], 0)   # (2, H, WC)
    b2row = jnp.tile(b2.astype(f32), W)[None, :]                  # (1, WC)

    return dict(wbd1=blockdiag_taps(w1), wbd2=blockdiag_taps(w2),
                ln2d=ln2d, b2row=b2row)


def residual_block_forward(x, gamma1, beta1, params):
    """ResidualBlock(resample=None, input_dim==output_dim) forward.

    x: (N, C, H, W) f32.  gamma1/beta1: (C,) BatchNorm2d affine.
    params: output of prepare_params (pre-laid-out conv/LN/bias operands).
    """
    f32 = jnp.float32
    N, C, H, W = x.shape
    wbd1, wbd2 = params["wbd1"], params["wbd2"]
    ln2d, b2row = params["ln2d"], params["b2row"]
    KK = wbd1.shape[0]
    K = int(round(KK ** 0.5))
    P = (K - 1) // 2
    Hp, WpC = H + 2 * P, (W + 2 * P) * C
    WC = W * C
    cnt = float(C * H * W)                    # LayerNorm element count (per sample)

    # ---------------- JAX glue: layout + BatchNorm batch stats ----------------
    x2d = jnp.transpose(x, (0, 2, 3, 1)).astype(f32).reshape(N, H, WC)   # (N, H, W*C)

    # Training-mode BatchNorm2d: batch statistics (biased var), affine folded to scale/shift.
    mu = jnp.mean(x, axis=(0, 2, 3)).astype(f32)
    var = jnp.var(x, axis=(0, 2, 3)).astype(f32)
    bn_scale = gamma1.astype(f32) / jnp.sqrt(var + EPS)
    bn_shift = beta1.astype(f32) - mu * bn_scale
    bn_row = jnp.stack([jnp.tile(bn_scale, W), jnp.tile(bn_shift, W)], 0)  # (2, WC)

    # ------------------------- fused per-sample kernel -------------------------
    def kernel(x_ref, bn_ref, w1_ref, ln_ref, w2_ref, b_ref, o_ref, pad_buf):
        # Zero-ringed padded scratch: implicit zero padding for both convolutions.
        pad_buf[...] = jnp.zeros_like(pad_buf)

        xs = x_ref[0]                                            # (H, WC) — also residual
        # BatchNorm affine + ReLU on the unpadded interior, written into the padded scratch.
        h = jnp.maximum(xs * bn_ref[0:1, :] + bn_ref[1:2, :], 0.0)
        pad_buf[P:P + H, P * C:P * C + WC] = h

        # conv_1: K*K shifted-window matmuls (kw column-slice hoisted out of the kh loop).
        hp = pad_buf[...]                                        # (Hp, WpC)
        acc1 = jnp.zeros((H, WC), jnp.float32)
        for kw in range(K):
            h_kw = hp[:, kw * C:kw * C + WC]                     # K lane shifts total
            for kh in range(K):
                acc1 = acc1 + jnp.dot(h_kw[kh:kh + H, :], w1_ref[kh * K + kw],
                                      preferred_element_type=jnp.float32)

        # Per-sample LayerNorm: two-pass centered variance, finalized in-kernel.
        mean = jnp.sum(jnp.sum(acc1, axis=1, keepdims=True), axis=0, keepdims=True) / cnt
        d = acc1 - mean
        var_s = jnp.sum(jnp.sum(d * d, axis=1, keepdims=True), axis=0, keepdims=True) / cnt
        inv = lax.rsqrt(var_s + EPS)
        z = jnp.maximum(d * inv * ln_ref[0] + ln_ref[1], 0.0)
        pad_buf[P:P + H, P * C:P * C + WC] = z                   # ring stays zero

        # conv_2 + bias + residual add.
        zp = pad_buf[...]
        acc2 = jnp.zeros((H, WC), jnp.float32)
        for kw in range(K):
            z_kw = zp[:, kw * C:kw * C + WC]
            for kh in range(K):
                acc2 = acc2 + jnp.dot(z_kw[kh:kh + H, :], w2_ref[kh * K + kw],
                                      preferred_element_type=jnp.float32)
        o_ref[0] = acc2 + b_ref[...] + xs

    out2d = pl.pallas_call(
        kernel,
        out_shape=jax.ShapeDtypeStruct((N, H, WC), f32),
        grid_spec=pltpu.PrefetchScalarGridSpec(
            num_scalar_prefetch=0, grid=(N,),
            in_specs=[pl.BlockSpec((1, H, WC), lambda n: (n, 0, 0)),
                      pl.BlockSpec((2, WC), lambda n: (0, 0)),
                      pl.BlockSpec((KK, WC, WC), lambda n: (0, 0, 0)),
                      pl.BlockSpec((2, H, WC), lambda n: (0, 0, 0)),
                      pl.BlockSpec((KK, WC, WC), lambda n: (0, 0, 0)),
                      pl.BlockSpec((1, WC), lambda n: (0, 0))],
            out_specs=pl.BlockSpec((1, H, WC), lambda n: (n, 0, 0)),
            scratch_shapes=[pltpu.VMEM((Hp, WpC), jnp.float32)]),
        compiler_params=pltpu.CompilerParams(
            dimension_semantics=("parallel",)),
    )(x2d, bn_row, wbd1, ln2d, wbd2, b2row)

    return jnp.transpose(out2d.reshape(N, H, W, C), (0, 3, 1, 2))


def residual_block(x, gamma1, beta1, w1, ln_w, ln_b, w2, b2):
    """Convenience one-shot wrapper (for repeated calls, hoist prepare_params out)."""
    return residual_block_forward(x, gamma1, beta1, prepare_params(w1, ln_w, ln_b, w2, b2))


# ---------------- pure-JAX reference (for verification) ----------------

def _reference(x, gamma1, beta1, w1, ln_w, ln_b, w2, b2):
    K = w1.shape[-1]
    P = (K - 1) // 2
    mu = x.mean(axis=(0, 2, 3), keepdims=True)
    var = x.var(axis=(0, 2, 3), keepdims=True)
    h = (x - mu) / jnp.sqrt(var + EPS) * gamma1[None, :, None, None] \
        + beta1[None, :, None, None]
    h = jnp.maximum(h, 0.0)
    y1 = lax.conv_general_dilated(h, w1, (1, 1), [(P, P), (P, P)],
                                  dimension_numbers=("NCHW", "OIHW", "NCHW"))
    m = y1.mean(axis=(1, 2, 3), keepdims=True)
    v = ((y1 - m) ** 2).mean(axis=(1, 2, 3), keepdims=True)
    z = (y1 - m) / jnp.sqrt(v + EPS) * ln_w[None] + ln_b[None]
    z = jnp.maximum(z, 0.0)
    y2 = lax.conv_general_dilated(z, w2, (1, 1), [(P, P), (P, P)],
                                  dimension_numbers=("NCHW", "OIHW", "NCHW"))
    y2 = y2 + b2[None, :, None, None]
    return x + y2


if __name__ == "__main__":
    # ResidualBlock(input_dim=4, output_dim=4, kernel_size=3, resample=None, hw=16)
    N, C, H, W = 2, 4, 16, 16
    K = 3

    key = jax.random.PRNGKey(0)
    ks = jax.random.split(key, 8)
    x = jax.random.normal(ks[0], (N, C, H, W), jnp.float32)
    gamma1 = 1.0 + 0.1 * jax.random.normal(ks[1], (C,), jnp.float32)      # bn1 weight
    beta1 = 0.1 * jax.random.normal(ks[2], (C,), jnp.float32)             # bn1 bias
    w1 = 0.1 * jax.random.normal(ks[3], (C, C, K, K), jnp.float32)        # conv_1 (no bias)
    ln_w = 1.0 + 0.1 * jax.random.normal(ks[4], (C, H, W), jnp.float32)   # bn2 (LayerNorm) weight
    ln_b = 0.1 * jax.random.normal(ks[5], (C, H, W), jnp.float32)         # bn2 (LayerNorm) bias
    w2 = 0.1 * jax.random.normal(ks[6], (C, C, K, K), jnp.float32)        # conv_2 weight
    b2 = 0.1 * jax.random.normal(ks[7], (C,), jnp.float32)                # conv_2 bias

    # One-time weight re-layout (outside the per-step jit), then jitted fused forward.
    params = prepare_params(w1, ln_w, ln_b, w2, b2)
    fwd = jax.jit(residual_block_forward)
    out = jax.block_until_ready(fwd(x, gamma1, beta1, params))

    ref = _reference(x, gamma1, beta1, w1, ln_w, ln_b, w2, b2)
    assert out.shape == (N, C, H, W), out.shape
    max_err = float(jnp.max(jnp.abs(out - ref)))
    assert jnp.allclose(out, ref, atol=1e-3, rtol=1e-3), max_err
    print("KERNEL_OK")
</pallas_src>

<mosaic_0001>
module attributes {stable_mosaic.version = 11 : i64} {
  func.func @kernel(%arg0: i32, %arg1: memref<1x16x64xf32, #tpu.memory_space<vmem>>, %arg2: memref<2x64xf32, #tpu.memory_space<vmem>>, %arg3: memref<9x64x64xf32, #tpu.memory_space<vmem>>, %arg4: memref<2x16x64xf32, #tpu.memory_space<vmem>>, %arg5: memref<9x64x64xf32, #tpu.memory_space<vmem>>, %arg6: memref<1x64xf32, #tpu.memory_space<vmem>>, %arg7: memref<1x16x64xf32, #tpu.memory_space<vmem>>, %arg8: memref<18x72xf32, #tpu.memory_space<vmem>>) attributes {dimension_semantics = [#tpu.dimension_semantics<parallel>], iteration_bounds = array<i64: 2>, scalar_prefetch = 0 : i64, scratch_operands = 1 : i64, tpu.core_type = #tpu.core_type<tc>, window_params = [{transform_indices = @transform_0, window_bounds = array<i64: 1, 16, 64>}, {pipeline_mode = #tpu.pipeline_mode<synchronous>, transform_indices = @transform_1, window_bounds = array<i64: 2, 64>}, {pipeline_mode = #tpu.pipeline_mode<synchronous>, transform_indices = @transform_2, window_bounds = array<i64: 9, 64, 64>}, {pipeline_mode = #tpu.pipeline_mode<synchronous>, transform_indices = @transform_3, window_bounds = array<i64: 2, 16, 64>}, {pipeline_mode = #tpu.pipeline_mode<synchronous>, transform_indices = @transform_4, window_bounds = array<i64: 9, 64, 64>}, {pipeline_mode = #tpu.pipeline_mode<synchronous>, transform_indices = @transform_5, window_bounds = array<i64: 1, 64>}, {transform_indices = @transform_6, window_bounds = array<i64: 1, 16, 64>}]} {
    %cst = arith.constant 0.000000e+00 : f32
    %0 = vector.broadcast %cst : f32 to vector<18x72xf32>
    %c0 = arith.constant 0 : index
    %c0_0 = arith.constant 0 : index
    %1 = vector.load %arg8[%c0, %c0_0] : memref<18x72xf32, #tpu.memory_space<vmem>>, vector<18x72xf32>
    tpu.vector_store %arg8[%c0, %c0_0], %0 {strides = array<i32>} : memref<18x72xf32, #tpu.memory_space<vmem>>, vector<18x72xf32>,
    %c0_1 = arith.constant 0 : index
    %c0_2 = arith.constant 0 : index
    %c0_3 = arith.constant 0 : index
    %2 = vector.load %arg1[%c0_1, %c0_2, %c0_3] : memref<1x16x64xf32, #tpu.memory_space<vmem>>, vector<1x16x64xf32>
    %3 = vector.shape_cast %2 : vector<1x16x64xf32> to vector<16x64xf32>
    %c0_4 = arith.constant 0 : index
    %c0_5 = arith.constant 0 : index
    %4 = vector.load %arg2[%c0_4, %c0_5] : memref<2x64xf32, #tpu.memory_space<vmem>>, vector<1x64xf32>
    %5 = vector.broadcast %4 : vector<1x64xf32> to vector<16x64xf32>
    %6 = arith.mulf %3, %5 : vector<16x64xf32>
    %c1 = arith.constant 1 : index
    %c0_6 = arith.constant 0 : index
    %7 = vector.load %arg2[%c1, %c0_6] : memref<2x64xf32, #tpu.memory_space<vmem>>, vector<1x64xf32>
    %8 = vector.broadcast %7 : vector<1x64xf32> to vector<16x64xf32>
    %9 = arith.addf %6, %8 : vector<16x64xf32>
    %cst_7 = arith.constant 0.000000e+00 : f32
    %10 = vector.broadcast %cst_7 : f32 to vector<16x64xf32>
    %11 = arith.maximumf %9, %10 : vector<16x64xf32>
    %c1_8 = arith.constant 1 : index
    %c4 = arith.constant 4 : index
    %12 = vector.load %arg8[%c1_8, %c4] : memref<18x72xf32, #tpu.memory_space<vmem>>, vector<16x64xf32>
    tpu.vector_store %arg8[%c1_8, %c4], %11 {strides = array<i32>} : memref<18x72xf32, #tpu.memory_space<vmem>>, vector<16x64xf32>,
    %c0_9 = arith.constant 0 : index
    %c0_10 = arith.constant 0 : index
    %13 = vector.load %arg8[%c0_9, %c0_10] : memref<18x72xf32, #tpu.memory_space<vmem>>, vector<18x72xf32>
    %cst_11 = arith.constant 0.000000e+00 : f32
    %14 = vector.broadcast %cst_11 : f32 to vector<16x64xf32>
    %15 = vector.extract_strided_slice %13 {offsets = [0, 0], sizes = [18, 64], strides = [1, 1]} : vector<18x72xf32> to vector<18x64xf32>
    %16 = vector.extract_strided_slice %15 {offsets = [0, 0], sizes = [16, 64], strides = [1, 1]} : vector<18x64xf32> to vector<16x64xf32>
    %c0_12 = arith.constant 0 : index
    %c0_13 = arith.constant 0 : index
    %c0_14 = arith.constant 0 : index
    %17 = vector.load %arg3[%c0_12, %c0_13, %c0_14] : memref<9x64x64xf32, #tpu.memory_space<vmem>>, vector<1x64x64xf32>
    %18 = vector.shape_cast %17 : vector<1x64x64xf32> to vector<64x64xf32>
    %cst_15 = arith.constant dense<0.000000e+00> : vector<16x64xf32>
    %19 = tpu.matmul %16, %18, %cst_15 {dimension_numbers = #tpu.dot_dimension_numbers<[1], [0], [0], [1], [0, 0, 1, 1], [], []>} : vector<16x64xf32>, vector<64x64xf32>, vector<16x64xf32> -> vector<16x64xf32>
    %20 = arith.addf %14, %19 : vector<16x64xf32>
    %21 = vector.extract_strided_slice %15 {offsets = [1, 0], sizes = [16, 64], strides = [1, 1]} : vector<18x64xf32> to vector<16x64xf32>
    %c3 = arith.constant 3 : index
    %c0_16 = arith.constant 0 : index
    %c0_17 = arith.constant 0 : index
    %22 = vector.load %arg3[%c3, %c0_16, %c0_17] : memref<9x64x64xf32, #tpu.memory_space<vmem>>, vector<1x64x64xf32>
    %23 = vector.shape_cast %22 : vector<1x64x64xf32> to vector<64x64xf32>
    %cst_18 = arith.constant dense<0.000000e+00> : vector<16x64xf32>
    %24 = tpu.matmul %21, %23, %cst_18 {dimension_numbers = #tpu.dot_dimension_numbers<[1], [0], [0], [1], [0, 0, 1, 1], [], []>} : vector<16x64xf32>, vector<64x64xf32>, vector<16x64xf32> -> vector<16x64xf32>
    %25 = arith.addf %20, %24 : vector<16x64xf32>
    %26 = vector.extract_strided_slice %15 {offsets = [2, 0], sizes = [16, 64], strides = [1, 1]} : vector<18x64xf32> to vector<16x64xf32>
    %c6 = arith.constant 6 : index
    %c0_19 = arith.constant 0 : index
    %c0_20 = arith.constant 0 : index
    %27 = vector.load %arg3[%c6, %c0_19, %c0_20] : memref<9x64x64xf32, #tpu.memory_space<vmem>>, vector<1x64x64xf32>
    %28 = vector.shape_cast %27 : vector<1x64x64xf32> to vector<64x64xf32>
    %cst_21 = arith.constant dense<0.000000e+00> : vector<16x64xf32>
    %29 = tpu.matmul %26, %28, %cst_21 {dimension_numbers = #tpu.dot_dimension_numbers<[1], [0], [0], [1], [0, 0, 1, 1], [], []>} : vector<16x64xf32>, vector<64x64xf32>, vector<16x64xf32> -> vector<16x64xf32>
    %30 = arith.addf %25, %29 : vector<16x64xf32>
    %31 = vector.extract_strided_slice %13 {offsets = [0, 4], sizes = [18, 64], strides = [1, 1]} : vector<18x72xf32> to vector<18x64xf32>
    %32 = vector.extract_strided_slice %31 {offsets = [0, 0], sizes = [16, 64], strides = [1, 1]} : vector<18x64xf32> to vector<16x64xf32>
    %c1_22 = arith.constant 1 : index
    %c0_23 = arith.constant 0 : index
    %c0_24 = arith.constant 0 : index
    %33 = vector.load %arg3[%c1_22, %c0_23, %c0_24] : memref<9x64x64xf32, #tpu.memory_space<vmem>>, vector<1x64x64xf32>
    %34 = vector.shape_cast %33 : vector<1x64x64xf32> to vector<64x64xf32>
    %cst_25 = arith.constant dense<0.000000e+00> : vector<16x64xf32>
    %35 = tpu.matmul %32, %34, %cst_25 {dimension_numbers = #tpu.dot_dimension_numbers<[1], [0], [0], [1], [0, 0, 1, 1], [], []>} : vector<16x64xf32>, vector<64x64xf32>, vector<16x64xf32> -> vector<16x64xf32>
    %36 = arith.addf %30, %35 : vector<16x64xf32>
    %37 = vector.extract_strided_slice %31 {offsets = [1, 0], sizes = [16, 64], strides = [1, 1]} : vector<18x64xf32> to vector<16x64xf32>
    %c4_26 = arith.constant 4 : index
    %c0_27 = arith.constant 0 : index
    %c0_28 = arith.constant 0 : index
    %38 = vector.load %arg3[%c4_26, %c0_27, %c0_28] : memref<9x64x64xf32, #tpu.memory_space<vmem>>, vector<1x64x64xf32>
    %39 = vector.shape_cast %38 : vector<1x64x64xf32> to vector<64x64xf32>
    %cst_29 = arith.constant dense<0.000000e+00> : vector<16x64xf32>
    %40 = tpu.matmul %37, %39, %cst_29 {dimension_numbers = #tpu.dot_dimension_numbers<[1], [0], [0], [1], [0, 0, 1, 1], [], []>} : vector<16x64xf32>, vector<64x64xf32>, vector<16x64xf32> -> vector<16x64xf32>
    %41 = arith.addf %36, %40 : vector<16x64xf32>
    %42 = vector.extract_strided_slice %31 {offsets = [2, 0], sizes = [16, 64], strides = [1, 1]} : vector<18x64xf32> to vector<16x64xf32>
    %c7 = arith.constant 7 : index
    %c0_30 = arith.constant 0 : index
    %c0_31 = arith.constant 0 : index
    %43 = vector.load %arg3[%c7, %c0_30, %c0_31] : memref<9x64x64xf32, #tpu.memory_space<vmem>>, vector<1x64x64xf32>
    %44 = vector.shape_cast %43 : vector<1x64x64xf32> to vector<64x64xf32>
    %cst_32 = arith.constant dense<0.000000e+00> : vector<16x64xf32>
    %45 = tpu.matmul %42, %44, %cst_32 {dimension_numbers = #tpu.dot_dimension_numbers<[1], [0], [0], [1], [0, 0, 1, 1], [], []>} : vector<16x64xf32>, vector<64x64xf32>, vector<16x64xf32> -> vector<16x64xf32>
    %46 = arith.addf %41, %45 : vector<16x64xf32>
    %47 = vector.extract_strided_slice %13 {offsets = [0, 8], sizes = [18, 64], strides = [1, 1]} : vector<18x72xf32> to vector<18x64xf32>
    %48 = vector.extract_strided_slice %47 {offsets = [0, 0], sizes = [16, 64], strides = [1, 1]} : vector<18x64xf32> to vector<16x64xf32>
    %c2 = arith.constant 2 : index
    %c0_33 = arith.constant 0 : index
    %c0_34 = arith.constant 0 : index
    %49 = vector.load %arg3[%c2, %c0_33, %c0_34] : memref<9x64x64xf32, #tpu.memory_space<vmem>>, vector<1x64x64xf32>
    %50 = vector.shape_cast %49 : vector<1x64x64xf32> to vector<64x64xf32>
    %cst_35 = arith.constant dense<0.000000e+00> : vector<16x64xf32>
    %51 = tpu.matmul %48, %50, %cst_35 {dimension_numbers = #tpu.dot_dimension_numbers<[1], [0], [0], [1], [0, 0, 1, 1], [], []>} : vector<16x64xf32>, vector<64x64xf32>, vector<16x64xf32> -> vector<16x64xf32>
    %52 = arith.addf %46, %51 : vector<16x64xf32>
    %53 = vector.extract_strided_slice %47 {offsets = [1, 0], sizes = [16, 64], strides = [1, 1]} : vector<18x64xf32> to vector<16x64xf32>
    %c5 = arith.constant 5 : index
    %c0_36 = arith.constant 0 : index
    %c0_37 = arith.constant 0 : index
    %54 = vector.load %arg3[%c5, %c0_36, %c0_37] : memref<9x64x64xf32, #tpu.memory_space<vmem>>, vector<1x64x64xf32>
    %55 = vector.shape_cast %54 : vector<1x64x64xf32> to vector<64x64xf32>
    %cst_38 = arith.constant dense<0.000000e+00> : vector<16x64xf32>
    %56 = tpu.matmul %53, %55, %cst_38 {dimension_numbers = #tpu.dot_dimension_numbers<[1], [0], [0], [1], [0, 0, 1, 1], [], []>} : vector<16x64xf32>, vector<64x64xf32>, vector<16x64xf32> -> vector<16x64xf32>
    %57 = arith.addf %52, %56 : vector<16x64xf32>
    %58 = vector.extract_strided_slice %47 {offsets = [2, 0], sizes = [16, 64], strides = [1, 1]} : vector<18x64xf32> to vector<16x64xf32>
    %c8 = arith.constant 8 : index
    %c0_39 = arith.constant 0 : index
    %c0_40 = arith.constant 0 : index
    %59 = vector.load %arg3[%c8, %c0_39, %c0_40] : memref<9x64x64xf32, #tpu.memory_space<vmem>>, vector<1x64x64xf32>
    %60 = vector.shape_cast %59 : vector<1x64x64xf32> to vector<64x64xf32>
    %cst_41 = arith.constant dense<0.000000e+00> : vector<16x64xf32>
    %61 = tpu.matmul %58, %60, %cst_41 {dimension_numbers = #tpu.dot_dimension_numbers<[1], [0], [0], [1], [0, 0, 1, 1], [], []>} : vector<16x64xf32>, vector<64x64xf32>, vector<16x64xf32> -> vector<16x64xf32>
    %62 = arith.addf %57, %61 : vector<16x64xf32>
    %cst_42 = arith.constant dense<0.000000e+00> : vector<16xf32>
    %63 = vector.multi_reduction <add>, %62, %cst_42 [1] : vector<16x64xf32> to vector<16xf32>
    %64 = vector.shape_cast %63 : vector<16xf32> to vector<16x1xf32>
    %cst_43 = arith.constant dense<0.000000e+00> : vector<1xf32>
    %65 = vector.multi_reduction <add>, %64, %cst_43 [0] : vector<16x1xf32> to vector<1xf32>
    %66 = vector.shape_cast %65 : vector<1xf32> to vector<1x1xf32>
    %cst_44 = arith.constant 1.024000e+03 : f32
    %67 = vector.broadcast %cst_44 : f32 to vector<1x1xf32>
    %68 = arith.divf %66, %67 : vector<1x1xf32>
    %69 = vector.broadcast %68 : vector<1x1xf32> to vector<16x64xf32>
    %70 = arith.subf %62, %69 : vector<16x64xf32>
    %71 = arith.mulf %70, %70 : vector<16x64xf32>
    %cst_45 = arith.constant dense<0.000000e+00> : vector<16xf32>
    %72 = vector.multi_reduction <add>, %71, %cst_45 [1] : vector<16x64xf32> to vector<16xf32>
    %73 = vector.shape_cast %72 : vector<16xf32> to vector<16x1xf32>
    %cst_46 = arith.constant dense<0.000000e+00> : vector<1xf32>
    %74 = vector.multi_reduction <add>, %73, %cst_46 [0] : vector<16x1xf32> to vector<1xf32>
    %75 = vector.shape_cast %74 : vector<1xf32> to vector<1x1xf32>
    %cst_47 = arith.constant 1.024000e+03 : f32
    %76 = vector.broadcast %cst_47 : f32 to vector<1x1xf32>
    %77 = arith.divf %75, %76 : vector<1x1xf32>
    %cst_48 = arith.constant 9.99999974E-6 : f32
    %78 = vector.broadcast %cst_48 : f32 to vector<1x1xf32>
    %79 = arith.addf %77, %78 : vector<1x1xf32>
    %80 = math.rsqrt %79 : vector<1x1xf32>
    %81 = vector.broadcast %80 : vector<1x1xf32> to vector<16x64xf32>
    %82 = arith.mulf %70, %81 : vector<16x64xf32>
    %c0_49 = arith.constant 0 : index
    %c0_50 = arith.constant 0 : index
    %c0_51 = arith.constant 0 : index
    %83 = vector.load %arg4[%c0_49, %c0_50, %c0_51] : memref<2x16x64xf32, #tpu.memory_space<vmem>>, vector<1x16x64xf32>
    %84 = vector.shape_cast %83 : vector<1x16x64xf32> to vector<16x64xf32>
    %85 = arith.mulf %82, %84 : vector<16x64xf32>
    %c1_52 = arith.constant 1 : index
    %c0_53 = arith.constant 0 : index
    %c0_54 = arith.constant 0 : index
    %86 = vector.load %arg4[%c1_52, %c0_53, %c0_54] : memref<2x16x64xf32, #tpu.memory_space<vmem>>, vector<1x16x64xf32>
    %87 = vector.shape_cast %86 : vector<1x16x64xf32> to vector<16x64xf32>
    %88 = arith.addf %85, %87 : vector<16x64xf32>
    %cst_55 = arith.constant 0.000000e+00 : f32
    %89 = vector.broadcast %cst_55 : f32 to vector<16x64xf32>
    %90 = arith.maximumf %88, %89 : vector<16x64xf32>
    %c1_56 = arith.constant 1 : index
    %c4_57 = arith.constant 4 : index
    %91 = vector.load %arg8[%c1_56, %c4_57] : memref<18x72xf32, #tpu.memory_space<vmem>>, vector<16x64xf32>
    tpu.vector_store %arg8[%c1_56, %c4_57], %90 {strides = array<i32>} : memref<18x72xf32, #tpu.memory_space<vmem>>, vector<16x64xf32>,
    %c0_58 = arith.constant 0 : index
    %c0_59 = arith.constant 0 : index
    %92 = vector.load %arg8[%c0_58, %c0_59] : memref<18x72xf32, #tpu.memory_space<vmem>>, vector<18x72xf32>
    %cst_60 = arith.constant 0.000000e+00 : f32
    %93 = vector.broadcast %cst_60 : f32 to vector<16x64xf32>
    %94 = vector.extract_strided_slice %92 {offsets = [0, 0], sizes = [18, 64], strides = [1, 1]} : vector<18x72xf32> to vector<18x64xf32>
    %95 = vector.extract_strided_slice %94 {offsets = [0, 0], sizes = [16, 64], strides = [1, 1]} : vector<18x64xf32> to vector<16x64xf32>
    %c0_61 = arith.constant 0 : index
    %c0_62 = arith.constant 0 : index
    %c0_63 = arith.constant 0 : index
    %96 = vector.load %arg5[%c0_61, %c0_62, %c0_63] : memref<9x64x64xf32, #tpu.memory_space<vmem>>, vector<1x64x64xf32>
    %97 = vector.shape_cast %96 : vector<1x64x64xf32> to vector<64x64xf32>
    %cst_64 = arith.constant dense<0.000000e+00> : vector<16x64xf32>
    %98 = tpu.matmul %95, %97, %cst_64 {dimension_numbers = #tpu.dot_dimension_numbers<[1], [0], [0], [1], [0, 0, 1, 1], [], []>} : vector<16x64xf32>, vector<64x64xf32>, vector<16x64xf32> -> vector<16x64xf32>
    %99 = arith.addf %93, %98 : vector<16x64xf32>
    %100 = vector.extract_strided_slice %94 {offsets = [1, 0], sizes = [16, 64], strides = [1, 1]} : vector<18x64xf32> to vector<16x64xf32>
    %c3_65 = arith.constant 3 : index
    %c0_66 = arith.constant 0 : index
    %c0_67 = arith.constant 0 : index
    %101 = vector.load %arg5[%c3_65, %c0_66, %c0_67] : memref<9x64x64xf32, #tpu.memory_space<vmem>>, vector<1x64x64xf32>
    %102 = vector.shape_cast %101 : vector<1x64x64xf32> to vector<64x64xf32>
    %cst_68 = arith.constant dense<0.000000e+00> : vector<16x64xf32>
    %103 = tpu.matmul %100, %102, %cst_68 {dimension_numbers = #tpu.dot_dimension_numbers<[1], [0], [0], [1], [0, 0, 1, 1], [], []>} : vector<16x64xf32>, vector<64x64xf32>, vector<16x64xf32> -> vector<16x64xf32>
    %104 = arith.addf %99, %103 : vector<16x64xf32>
    %105 = vector.extract_strided_slice %94 {offsets = [2, 0], sizes = [16, 64], strides = [1, 1]} : vector<18x64xf32> to vector<16x64xf32>
    %c6_69 = arith.constant 6 : index
    %c0_70 = arith.constant 0 : index
    %c0_71 = arith.constant 0 : index
    %106 = vector.load %arg5[%c6_69, %c0_70, %c0_71] : memref<9x64x64xf32, #tpu.memory_space<vmem>>, vector<1x64x64xf32>
    %107 = vector.shape_cast %106 : vector<1x64x64xf32> to vector<64x64xf32>
    %cst_72 = arith.constant dense<0.000000e+00> : vector<16x64xf32>
    %108 = tpu.matmul %105, %107, %cst_72 {dimension_numbers = #tpu.dot_dimension_numbers<[1], [0], [0], [1], [0, 0, 1, 1], [], []>} : vector<16x64xf32>, vector<64x64xf32>, vector<16x64xf32> -> vector<16x64xf32>
    %109 = arith.addf %104, %108 : vector<16x64xf32>
    %110 = vector.extract_strided_slice %92 {offsets = [0, 4], sizes = [18, 64], strides = [1, 1]} : vector<18x72xf32> to vector<18x64xf32>
    %111 = vector.extract_strided_slice %110 {offsets = [0, 0], sizes = [16, 64], strides = [1, 1]} : vector<18x64xf32> to vector<16x64xf32>
    %c1_73 = arith.constant 1 : index
    %c0_74 = arith.constant 0 : index
    %c0_75 = arith.constant 0 : index
    %112 = vector.load %arg5[%c1_73, %c0_74, %c0_75] : memref<9x64x64xf32, #tpu.memory_space<vmem>>, vector<1x64x64xf32>
    %113 = vector.shape_cast %112 : vector<1x64x64xf32> to vector<64x64xf32>
    %cst_76 = arith.constant dense<0.000000e+00> : vector<16x64xf32>
    %114 = tpu.matmul %111, %113, %cst_76 {dimension_numbers = #tpu.dot_dimension_numbers<[1], [0], [0], [1], [0, 0, 1, 1], [], []>} : vector<16x64xf32>, vector<64x64xf32>, vector<16x64xf32> -> vector<16x64xf32>
    %115 = arith.addf %109, %114 : vector<16x64xf32>
    %116 = vector.extract_strided_slice %110 {offsets = [1, 0], sizes = [16, 64], strides = [1, 1]} : vector<18x64xf32> to vector<16x64xf32>
    %c4_77 = arith.constant 4 : index
    %c0_78 = arith.constant 0 : index
    %c0_79 = arith.constant 0 : index
    %117 = vector.load %arg5[%c4_77, %c0_78, %c0_79] : memref<9x64x64xf32, #tpu.memory_space<vmem>>, vector<1x64x64xf32>
    %118 = vector.shape_cast %117 : vector<1x64x64xf32> to vector<64x64xf32>
    %cst_80 = arith.constant dense<0.000000e+00> : vector<16x64xf32>
    %119 = tpu.matmul %116, %118, %cst_80 {dimension_numbers = #tpu.dot_dimension_numbers<[1], [0], [0], [1], [0, 0, 1, 1], [], []>} : vector<16x64xf32>, vector<64x64xf32>, vector<16x64xf32> -> vector<16x64xf32>
    %120 = arith.addf %115, %119 : vector<16x64xf32>
    %121 = vector.extract_strided_slice %110 {offsets = [2, 0], sizes = [16, 64], strides = [1, 1]} : vector<18x64xf32> to vector<16x64xf32>
    %c7_81 = arith.constant 7 : index
    %c0_82 = arith.constant 0 : index
    %c0_83 = arith.constant 0 : index
    %122 = vector.load %arg5[%c7_81, %c0_82, %c0_83] : memref<9x64x64xf32, #tpu.memory_space<vmem>>, vector<1x64x64xf32>
    %123 = vector.shape_cast %122 : vector<1x64x64xf32> to vector<64x64xf32>
    %cst_84 = arith.constant dense<0.000000e+00> : vector<16x64xf32>
    %124 = tpu.matmul %121, %123, %cst_84 {dimension_numbers = #tpu.dot_dimension_numbers<[1], [0], [0], [1], [0, 0, 1, 1], [], []>} : vector<16x64xf32>, vector<64x64xf32>, vector<16x64xf32> -> vector<16x64xf32>
    %125 = arith.addf %120, %124 : vector<16x64xf32>
    %126 = vector.extract_strided_slice %92 {offsets = [0, 8], sizes = [18, 64], strides = [1, 1]} : vector<18x72xf32> to vector<18x64xf32>
    %127 = vector.extract_strided_slice %126 {offsets = [0, 0], sizes = [16, 64], strides = [1, 1]} : vector<18x64xf32> to vector<16x64xf32>
    %c2_85 = arith.constant 2 : index
    %c0_86 = arith.constant 0 : index
    %c0_87 = arith.constant 0 : index
    %128 = vector.load %arg5[%c2_85, %c0_86, %c0_87] : memref<9x64x64xf32, #tpu.memory_space<vmem>>, vector<1x64x64xf32>
    %129 = vector.shape_cast %128 : vector<1x64x64xf32> to vector<64x64xf32>
    %cst_88 = arith.constant dense<0.000000e+00> : vector<16x64xf32>
    %130 = tpu.matmul %127, %129, %cst_88 {dimension_numbers = #tpu.dot_dimension_numbers<[1], [0], [0], [1], [0, 0, 1, 1], [], []>} : vector<16x64xf32>, vector<64x64xf32>, vector<16x64xf32> -> vector<16x64xf32>
    %131 = arith.addf %125, %130 : vector<16x64xf32>
    %132 = vector.extract_strided_slice %126 {offsets = [1, 0], sizes = [16, 64], strides = [1, 1]} : vector<18x64xf32> to vector<16x64xf32>
    %c5_89 = arith.constant 5 : index
    %c0_90 = arith.constant 0 : index
    %c0_91 = arith.constant 0 : index
    %133 = vector.load %arg5[%c5_89, %c0_90, %c0_91] : memref<9x64x64xf32, #tpu.memory_space<vmem>>, vector<1x64x64xf32>
    %134 = vector.shape_cast %133 : vector<1x64x64xf32> to vector<64x64xf32>
    %cst_92 = arith.constant dense<0.000000e+00> : vector<16x64xf32>
    %135 = tpu.matmul %132, %134, %cst_92 {dimension_numbers = #tpu.dot_dimension_numbers<[1], [0], [0], [1], [0, 0, 1, 1], [], []>} : vector<16x64xf32>, vector<64x64xf32>, vector<16x64xf32> -> vector<16x64xf32>
    %136 = arith.addf %131, %135 : vector<16x64xf32>
    %137 = vector.extract_strided_slice %126 {offsets = [2, 0], sizes = [16, 64], strides = [1, 1]} : vector<18x64xf32> to vector<16x64xf32>
    %c8_93 = arith.constant 8 : index
    %c0_94 = arith.constant 0 : index
    %c0_95 = arith.constant 0 : index
    %138 = vector.load %arg5[%c8_93, %c0_94, %c0_95] : memref<9x64x64xf32, #tpu.memory_space<vmem>>, vector<1x64x64xf32>
    %139 = vector.shape_cast %138 : vector<1x64x64xf32> to vector<64x64xf32>
    %cst_96 = arith.constant dense<0.000000e+00> : vector<16x64xf32>
    %140 = tpu.matmul %137, %139, %cst_96 {dimension_numbers = #tpu.dot_dimension_numbers<[1], [0], [0], [1], [0, 0, 1, 1], [], []>} : vector<16x64xf32>, vector<64x64xf32>, vector<16x64xf32> -> vector<16x64xf32>
    %141 = arith.addf %136, %140 : vector<16x64xf32>
    %c0_97 = arith.constant 0 : index
    %c0_98 = arith.constant 0 : index
    %142 = vector.load %arg6[%c0_97, %c0_98] : memref<1x64xf32, #tpu.memory_space<vmem>>, vector<1x64xf32>
    %143 = vector.broadcast %142 : vector<1x64xf32> to vector<16x64xf32>
    %144 = arith.addf %141, %143 : vector<16x64xf32>
    %145 = arith.addf %144, %3 : vector<16x64xf32>
    %c0_99 = arith.constant 0 : index
    %c0_100 = arith.constant 0 : index
    %c0_101 = arith.constant 0 : index
    %146 = vector.load %arg7[%c0_99, %c0_100, %c0_101] : memref<1x16x64xf32, #tpu.memory_space<vmem>>, vector<1x16x64xf32>
    %147 = vector.shape_cast %146 : vector<1x16x64xf32> to vector<16x64xf32>
    %148 = vector.shape_cast %145 : vector<16x64xf32> to vector<1x16x64xf32>
    tpu.vector_store %arg7[%c0_99, %c0_100, %c0_101], %148 {strides = array<i32>} : memref<1x16x64xf32, #tpu.memory_space<vmem>>, vector<1x16x64xf32>,
    return
  }
  func.func @transform_0(%arg0: i32) -> (i32, i32, i32) {
    %c0_i32 = arith.constant 0 : i32
    %c0_i32_0 = arith.constant 0 : i32
    %c0_i32_1 = arith.constant 0 : i32
    return %arg0, %c0_i32, %c0_i32_0 : i32, i32, i32
  }
  func.func @transform_1(%arg0: i32) -> (i32, i32) {
    %c0_i32 = arith.constant 0 : i32
    %c0_i32_0 = arith.constant 0 : i32
    %c0_i32_1 = arith.constant 0 : i32
    return %c0_i32, %c0_i32_0 : i32, i32
  }
  func.func @transform_2(%arg0: i32) -> (i32, i32, i32) {
    %c0_i32 = arith.constant 0 : i32
    %c0_i32_0 = arith.constant 0 : i32
    %c0_i32_1 = arith.constant 0 : i32
    %c0_i32_2 = arith.constant 0 : i32
    return %c0_i32, %c0_i32_0, %c0_i32_1 : i32, i32, i32
  }
  func.func @transform_3(%arg0: i32) -> (i32, i32, i32) {
    %c0_i32 = arith.constant 0 : i32
    %c0_i32_0 = arith.constant 0 : i32
    %c0_i32_1 = arith.constant 0 : i32
    %c0_i32_2 = arith.constant 0 : i32
    return %c0_i32, %c0_i32_0, %c0_i32_1 : i32, i32, i32
  }
  func.func @transform_4(%arg0: i32) -> (i32, i32, i32) {
    %c0_i32 = arith.constant 0 : i32
    %c0_i32_0 = arith.constant 0 : i32
    %c0_i32_1 = arith.constant 0 : i32
    %c0_i32_2 = arith.constant 0 : i32
    return %c0_i32, %c0_i32_0, %c0_i32_1 : i32, i32, i32
  }
  func.func @transform_5(%arg0: i32) -> (i32, i32) {
    %c0_i32 = arith.constant 0 : i32
    %c0_i32_0 = arith.constant 0 : i32
    %c0_i32_1 = arith.constant 0 : i32
    return %c0_i32, %c0_i32_0 : i32, i32
  }
  func.func @transform_6(%arg0: i32) -> (i32, i32, i32) {
    %c0_i32 = arith.constant 0 : i32
    %c0_i32_0 = arith.constant 0 : i32
    %c0_i32_1 = arith.constant 0 : i32
    return %arg0, %c0_i32, %c0_i32_0 : i32, i32, i32
  }
}

</mosaic_0001>

<llo_original>
// kernel: tile.17
$region0: #{tile.17}
  #allocation0 [shape = 's32[1]{0}', space=sflag, size = 0x4, scoped, tag = 'scoped memory for tile.17']
  %s0 = inlined_call_operand.vmem [shape: f32[4], index: 0, kind: input, shape index: {}]
  %s1 = inlined_call_operand.vmem [shape: f32[16,4], index: 1, kind: output, shape index: {}]
  // Predicated region
  $region2: #{tile.17} parent=0 // pred_check
    _
  $region3: #{tile.17} parent=0 // pred_check_branch
    %3 = sbr.rel (0) target = $region5
  $region4: #{tile.17} parent=0 // pred_region
    _
  $region5: #{tile.17} parent=0 // pred_fallthru
    _
  %v4 = vld [vmem:[%s0] ss:$0 sm:$0xff]
  %5 = vst [vmem:[%s1] sm:$0xff] %v4
  %s6 = scalar_lea.vmem %s1, 8
  %7 = vst [vmem:[%s6] sm:$0xff] %v4

// kernel: tile.19
$region0: #{tile.19}
  %s0 = inlined_call_operand.vmem [shape: f32[16,4], index: 0, kind: input, shape index: {}]
  %s1 = inlined_call_operand.vmem [shape: f32[1,64], index: 1, kind: output, shape index: {}]
  $region1: #{tile.19} parent=0
    #allocation0 [shape = 'u8[4096]{0}', space=vmem, size = 0x1000, scoped, tag = 'scoped mem for output reshape']
    %v2 = vld [vmem:[%s0] sm:$0x1]
    %vm3 = vcmask 31744
    %4 = vst.msk [vmem:[#allocation0] sm:$0x1] %vm3, %v2
    %s5 = scalar_lea.vmem %s0, 15
    %v6 = vld [vmem:[%s5] sm:$0x1]
    %7 = vrot.lane.b32.xlu0 %v6, 60
    %v8 = vpop.permute.xlu0 %7
    %vm9 = vcmask 523744
    %10 = vst.msk [vmem:[#allocation0] sm:$0x1] %vm9, %v8
    %s11 = scalar_lea.vmem %s0, 14
    %v12 = vld [vmem:[%s11] sm:$0x1]
    %13 = vrot.lane.b32.xlu0 %v12, 56
    %v14 = vpop.permute.xlu0 %13
    %vm15 = vcmask 490944
    %16 = vst.msk [vmem:[#allocation0] sm:$0x1] %vm15, %v14
    %s17 = scalar_lea.vmem %s0, 13
    %v18 = vld [vmem:[%s17] sm:$0x1]
    %19 = vrot.lane.b32.xlu0 %v18, 52
    %v20 = vpop.permute.xlu0 %19
    %vm21 = vcmask 458144
    %22 = vst.msk [vmem:[#allocation0] sm:$0x1] %vm21, %v20
    %s23 = scalar_lea.vmem %s0, 12
    %v24 = vld [vmem:[%s23] sm:$0x1]
    %25 = vrot.lane.b32.xlu0 %v24, 48
    %v26 = vpop.permute.xlu0 %25
    %vm27 = vcmask 425344
    %28 = vst.msk [vmem:[#allocation0] sm:$0x1] %vm27, %v26
    %s29 = scalar_lea.vmem %s0, 11
    %v30 = vld [vmem:[%s29] sm:$0x1]
    %31 = vrot.lane.b32.xlu0 %v30, 44
    %v32 = vpop.permute.xlu0 %31
    %vm33 = vcmask 392544
    %34 = vst.msk [vmem:[#allocation0] sm:$0x1] %vm33, %v32
    %s35 = scalar_lea.vmem %s0, 10
    %v36 = vld [vmem:[%s35] sm:$0x1]
    %37 = vrot.lane.b32.xlu0 %v36, 40
    %v38 = vpop.permute.xlu0 %37
    %vm39 = vcmask 359744
    %40 = vst.msk [vmem:[#allocation0] sm:$0x1] %vm39, %v38
    %s41 = scalar_lea.vmem %s0, 9
    %v42 = vld [vmem:[%s41] sm:$0x1]
    %43 = vrot.lane.b32.xlu0 %v42, 36
    %v44 = vpop.permute.xlu0 %43
    %vm45 = vcmask 326944
    %46 = vst.msk [vmem:[#allocation0] sm:$0x1] %vm45, %v44
    %s47 = scalar_lea.vmem %s0, 8
    %v48 = vld [vmem:[%s47] sm:$0x1]
    %49 = vrot.lane.b32.xlu0 %v48, 32
    %v50 = vpop.permute.xlu0 %49
    %vm51 = vcmask 294144
    %52 = vst.msk [vmem:[#allocation0] sm:$0x1] %vm51, %v50
    %s53 = scalar_lea.vmem %s0, 7
    %v54 = vld [vmem:[%s53] sm:$0x1]
    %55 = vrot.lane.b32.xlu0 %v54, 28
    %v56 = vpop.permute.xlu0 %55
    %vm57 = vcmask 261344
    %58 = vst.msk [vmem:[#allocation0] sm:$0x1] %vm57, %v56
    %s59 = scalar_lea.vmem %s0, 6
    %v60 = vld [vmem:[%s59] sm:$0x1]
    %61 = vrot.lane.b32.xlu0 %v60, 24
    %v62 = vpop.permute.xlu0 %61
    %vm63 = vcmask 228544
    %64 = vst.msk [vmem:[#allocation0] sm:$0x1] %vm63, %v62
    %s65 = scalar_lea.vmem %s0, 5
    %v66 = vld [vmem:[%s65] sm:$0x1]
    %67 = vrot.lane.b32.xlu0 %v66, 20
    %v68 = vpop.permute.xlu0 %67
    %vm69 = vcmask 195744
    %70 = vst.msk [vmem:[#allocation0] sm:$0x1] %vm69, %v68
    %s71 = scalar_lea.vmem %s0, 4
    %v72 = vld [vmem:[%s71] sm:$0x1]
    %73 = vrot.lane.b32.xlu0 %v72, 16
    %v74 = vpop.permute.xlu0 %73
    %vm75 = vcmask 162944
    %76 = vst.msk [vmem:[#allocation0] sm:$0x1] %vm75, %v74
    %s77 = scalar_lea.vmem %s0, 3
    %v78 = vld [vmem:[%s77] sm:$0x1]
    %79 = vrot.lane.b32.xlu0 %v78, 12
    %v80 = vpop.permute.xlu0 %79
    %vm81 = vcmask 130144
    %82 = vst.msk [vmem:[#allocation0] sm:$0x1] %vm81, %v80
    %s83 = scalar_lea.vmem %s0, 2
    %v84 = vld [vmem:[%s83] sm:$0x1]
    %85 = vrot.lane.b32.xlu0 %v84, 8
    %v86 = vpop.permute.xlu0 %85
    %vm87 = vcmask 97344
    %88 = vst.msk [vmem:[#allocation0] sm:$0x1] %vm87, %v86
    %s89 = scalar_lea.vmem %s0, 1
    %v90 = vld [vmem:[%s89] sm:$0x1]
    %91 = vrot.lane.b32.xlu0 %v90, 4
    %v92 = vpop.permute.xlu0 %91
    %vm93 = vcmask 64544
    %94 = vst.msk [vmem:[#allocation0] sm:$0x1] %vm93, %v92
    %s96 = sshll.u32 1, 1
    %s97 = ssub.s32 %s96, 1
    %v99 = vld [vmem:[#allocation0] sm:%s97]
    %s100 = sshll.u32 1, 1
    %s101 = ssub.s32 %s100, 1
    %102 = vst [vmem:[%s1] sm:%s101] %v99

// kernel: residual_block_forward.1
$region0: #{residual_block_forward.1}
  #allocation0 [shape = 'u32[]', space=smem, size = 0x4, offset = 0x4, fixed_abs, tag = 'smem constant byte address 0x4 - core index']
  #allocation1 [shape = 'u32[144,128]{1,0:T(1,128)}', space=vmem, size = 0x12000, scoped, tag = 'internal scratch']
  #allocation2 [shape = 'f32[18,72]{1,0:T(8,128)}', space=vmem, size = 0x3000, scoped, tag = 'scratch operand']
  %s0 = inlined_call_operand.vmem [shape: f32[2,16,64], index: 0, kind: input, shape index: {}]
  %s1 = inlined_call_operand.vmem [shape: f32[2,64], index: 1, kind: input, shape index: {}]
  %s2 = inlined_call_operand.vmem [shape: f32[9,64,64], index: 2, kind: input, shape index: {}]
  %s3 = inlined_call_operand.vmem [shape: f32[2,16,64], index: 3, kind: input, shape index: {}]
  %s4 = inlined_call_operand.hbm [shape: f32[9,64,64], index: 4, kind: input, shape index: {}]
  %s5 = inlined_call_operand.vmem [shape: f32[1,64], index: 5, kind: input, shape index: {}]
  %s6 = inlined_call_operand.vmem [shape: f32[2,16,64], index: 6, kind: output, shape index: {}]
  %s7 = sld [smem:[#allocation0]]
  $region61: #{residual_block_forward.1} parent=0
    _
  %s9 = ssub.s32 1, %s7
  %s10 = scalar_select 0, %s9, %s7
  $region1: #{residual_block_forward.1} parent=0
    #allocation3 [shape = 'u8[294912]{0}', space=vmem, size = 0x48000, scoped, tag = 'input window, operand 4, single buffered']
    #allocation4 [shape = 's32[2]{0}', space=sflag, size = 0x8, scoped, tag = 'scoped memory for residual_block_forward.1']
    %11 = vsyncpa [#allocation4], 0
    loop: start=0, step=1, limit=4
    $region2: #{residual_block_forward.1} parent=1 // loop_pre_header
      _
    $region3: #{residual_block_forward.1} parent=1 // loop_header
      %s13 = sphi 0, %s17
      %p14 = scmp.ge.s32.totalorder %s13, 4
      %s23 = sphi 0, %s25
      %s26 = sphi 0, %s23
      %s27 = sphi 0, %s26
      %s43 = sphi 0, %s27
      %s47 = sphi 0, %s47
      %s49 = sphi 0, %s47
      %s50 = sphi 0, %s49
      %s64 = sphi 0, %s50
      %s68 = sphi 0, %s68
      %s70 = sphi 0, %s68
      %s71 = sphi 0, %s70
      %s85 = sphi 0, %s71
      %s89 = sphi 0, %s89
      %s91 = sphi 0, %s89
      %s92 = sphi 0, %s91
      %s106 = sphi 0, %s92
      %s110 = sphi 0, %s110
      %s112 = sphi 0, %s110
      %s113 = sphi 0, %s112
      %s127 = sphi 0, %s113
      %s131 = sphi 0, %s131
      %s133 = sphi 0, %s131
      %s134 = sphi 0, %s133
      %s148 = sphi 0, %s134
      %s154 = sphi 0, %s156
      %s157 = sphi 0, %s154
      %s158 = sphi 0, %s157
      %s174 = sphi 0, %s158
    $region4: #{residual_block_forward.1} parent=1 // loop_header_branch
      %16 = sbr.rel (%p14) target = $region8
    $region5: #{residual_block_forward.1} parent=1 // loop_body
      %s18 = ssub.s32 %s13, 1
      %s19 = ssub.s32 %s13, 2
      %s20 = sadd.s32 %s13, 1
      %s21 = ssub.s32 %s13, %s20
      %p22 = scmp.eq.s32.totalorder %s21, 0
      %s24 = sadd.s32 %s23, 1
      %s25 = scalar_select %p22, %s23, %s24
      %p28 = pneg %p22
      %p29 = scmp.eq.s32.totalorder %s13, 1
      %p30 = por %p28, %p29
      %p31 = scmp.ne.s32.totalorder %s23, %s26
      %p32 = scmp.eq.s32.totalorder %s13, 0
      %p33 = por %p31, %p32
      %p34 = scmp.ne.s32.totalorder %s23, %s26
      %p35 = scmp.eq.s32.totalorder %s18, 1
      %p36 = por %p34, %p35
      %p37 = scmp.ne.s32.totalorder %s26, %s27
      %p38 = scmp.eq.s32.totalorder %s18, 0
      %p39 = por %p37, %p38
      %p40 = scmp.ne.s32.totalorder %s26, %s27
      %p41 = scmp.eq.s32.totalorder %s19, 1
      %p42 = por %p40, %p41
      %p44 = scmp.ne.s32.totalorder %s27, %s43
      %p45 = scmp.eq.s32.totalorder %s19, 0
      %p46 = por %p44, %p45
      %s48 = sadd.s32 %s47, 1
      %p51 = scmp.eq.s32.totalorder %s13, 1
      %p52 = scmp.ne.s32.totalorder %s47, %s49
      %p53 = scmp.eq.s32.totalorder %s13, 0
      %p54 = por %p52, %p53
      %p55 = scmp.ne.s32.totalorder %s47, %s49
      %p56 = scmp.eq.s32.totalorder %s18, 1
      %p57 = por %p55, %p56
      %p58 = scmp.ne.s32.totalorder %s49, %s50
      %p59 = scmp.eq.s32.totalorder %s18, 0
      %p60 = por %p58, %p59
      %p61 = scmp.ne.s32.totalorder %s49, %s50
      %p62 = scmp.eq.s32.totalorder %s19, 1
      %p63 = por %p61, %p62
      %p65 = scmp.ne.s32.totalorder %s50, %s64
      %p66 = scmp.eq.s32.totalorder %s19, 0
      %p67 = por %p65, %p66
      %s69 = sadd.s32 %s68, 1
      %p72 = scmp.eq.s32.totalorder %s13, 1
      %p73 = scmp.ne.s32.totalorder %s68, %s70
      %p74 = scmp.eq.s32.totalorder %s13, 0
      %p75 = por %p73, %p74
      %p76 = scmp.ne.s32.totalorder %s68, %s70
      %p77 = scmp.eq.s32.totalorder %s18, 1
      %p78 = por %p76, %p77
      %p79 = scmp.ne.s32.totalorder %s70, %s71
      %p80 = scmp.eq.s32.totalorder %s18, 0
      %p81 = por %p79, %p80
      %p82 = scmp.ne.s32.totalorder %s70, %s71
      %p83 = scmp.eq.s32.totalorder %s19, 1
      %p84 = por %p82, %p83
      %p86 = scmp.ne.s32.totalorder %s71, %s85
      %p87 = scmp.eq.s32.totalorder %s19, 0
      %p88 = por %p86, %p87
      %s90 = sadd.s32 %s89, 1
      %p93 = scmp.eq.s32.totalorder %s13, 1
      %p94 = scmp.ne.s32.totalorder %s89, %s91
      %p95 = scmp.eq.s32.totalorder %s13, 0
      %p96 = por %p94, %p95
      %p97 = scmp.ne.s32.totalorder %s89, %s91
      %p98 = scmp.eq.s32.totalorder %s18, 1
      %p99 = por %p97, %p98
      %p100 = scmp.ne.s32.totalorder %s91, %s92
      %p101 = scmp.eq.s32.totalorder %s18, 0
      %p102 = por %p100, %p101
      %p103 = scmp.ne.s32.totalorder %s91, %s92
      %p104 = scmp.eq.s32.totalorder %s19, 1
      %p105 = por %p103, %p104
      %p107 = scmp.ne.s32.totalorder %s92, %s106
      %p108 = scmp.eq.s32.totalorder %s19, 0
      %p109 = por %p107, %p108
      %s111 = sadd.s32 %s110, 1
      %p114 = scmp.eq.s32.totalorder %s13, 1
      %p115 = scmp.ne.s32.totalorder %s110, %s112
      %p116 = scmp.eq.s32.totalorder %s13, 0
      %p117 = por %p115, %p116
      %p118 = scmp.ne.s32.totalorder %s110, %s112
      %p119 = scmp.eq.s32.totalorder %s18, 1
      %p120 = por %p118, %p119
      %p121 = scmp.ne.s32.totalorder %s112, %s113
      %p122 = scmp.eq.s32.totalorder %s18, 0
      %p123 = por %p121, %p122
      %p124 = scmp.ne.s32.totalorder %s112, %s113
      %p125 = scmp.eq.s32.totalorder %s19, 1
      %p126 = por %p124, %p125
      %p128 = scmp.ne.s32.totalorder %s113, %s127
      %p129 = scmp.eq.s32.totalorder %s19, 0
      %p130 = por %p128, %p129
      %s132 = sadd.s32 %s131, 1
      %p135 = scmp.eq.s32.totalorder %s13, 1
      %p136 = scmp.ne.s32.totalorder %s131, %s133
      %p137 = scmp.eq.s32.totalorder %s13, 0
      %p138 = por %p136, %p137
      %p139 = scmp.ne.s32.totalorder %s131, %s133
      %p140 = scmp.eq.s32.totalorder %s18, 1
      %p141 = por %p139, %p140
      %p142 = scmp.ne.s32.totalorder %s133, %s134
      %p143 = scmp.eq.s32.totalorder %s18, 0
      %p144 = por %p142, %p143
      %p145 = scmp.ne.s32.totalorder %s133, %s134
      %p146 = scmp.eq.s32.totalorder %s19, 1
      %p147 = por %p145, %p146
      %p149 = scmp.ne.s32.totalorder %s134, %s148
      %p150 = scmp.eq.s32.totalorder %s19, 0
      %p151 = por %p149, %p150
      %s152 = ssub.s32 %s13, %s20
      %p153 = scmp.eq.s32.totalorder %s152, 0
      %s155 = sadd.s32 %s154, 1
      %s156 = scalar_select %p153, %s154, %s155
      %p159 = pneg %p153
      %p160 = scmp.eq.s32.totalorder %s13, 1
      %p161 = por %p159, %p160
      %p162 = scmp.ne.s32.totalorder %s154, %s157
      %p163 = scmp.eq.s32.totalorder %s13, 0
      %p164 = por %p162, %p163
      %p165 = scmp.ne.s32.totalorder %s154, %s157
      %p166 = scmp.eq.s32.totalorder %s18, 1
      %p167 = por %p165, %p166
      %p168 = scmp.ne.s32.totalorder %s157, %s158
      %p169 = scmp.eq.s32.totalorder %s18, 0
      %p170 = por %p168, %p169
      %p171 = scmp.ne.s32.totalorder %s157, %s158
      %p172 = scmp.eq.s32.totalorder %s19, 1
      %p173 = por %p171, %p172
      %p175 = scmp.ne.s32.totalorder %s158, %s174
      %p176 = scmp.eq.s32.totalorder %s19, 0
      %p177 = por %p175, %p176
      %p178 = scmp.le.s32.totalorder 1, %s13
      %p179 = scmp.lt.s32.totalorder %s13, 3
      %p180 = pnand %p178, %p179
      %p181 = pneg %p180
      // Predicated region
      $region9: #{residual_block_forward.1} parent=5 // pred_check
        _
      $region10: #{residual_block_forward.1} parent=5 // pred_check_branch
        %183 = sbr.rel (%p180) target = $region12
      $region11: #{residual_block_forward.1} parent=5 // pred_region
        %s184 = ssub.s32 %s13, 1
        // Predicated region
        $region13: #{residual_block_forward.1} parent=11 // pred_check
          %p185 = pneg %p60
        $region14: #{residual_block_forward.1} parent=11 // pred_check_branch
          %187 = sbr.rel (%p185) target = $region16
        $region15: #{residual_block_forward.1} parent=11 // pred_region
          _
        $region16: #{residual_block_forward.1} parent=11 // pred_fallthru
          _
        // Predicated region
        $region17: #{residual_block_forward.1} parent=11 // pred_check
          %p188 = pneg %p81
        $region18: #{residual_block_forward.1} parent=11 // pred_check_branch
          %190 = sbr.rel (%p188) target = $region20
        $region19: #{residual_block_forward.1} parent=11 // pred_region
          _
        $region20: #{residual_block_forward.1} parent=11 // pred_fallthru
          _
        // Predicated region
        $region21: #{residual_block_forward.1} parent=11 // pred_check
          %p191 = pneg %p102
        $region22: #{residual_block_forward.1} parent=11 // pred_check_branch
          %193 = sbr.rel (%p191) target = $region24
        $region23: #{residual_block_forward.1} parent=11 // pred_region
          _
        $region24: #{residual_block_forward.1} parent=11 // pred_fallthru
          _
        // Predicated region
        $region25: #{residual_block_forward.1} parent=11 // pred_check
          %p194 = pneg %p123
        $region26: #{residual_block_forward.1} parent=11 // pred_check_branch
          %196 = sbr.rel (%p194) target = $region28
        $region27: #{residual_block_forward.1} parent=11 // pred_region
          %s198 = ssub.s32 9216, 9216
          %199 = vsyncadd [#allocation4], %s198
          %s200 = sshll.u32 [#allocation3], 4
          %s201 = int_to_ptr.vmem [resolvable:$true] %s200
          %206 = dma.hbm_to_vmem [thread:$0]  %s4, 9216, %s201, [#allocation4], 128, 128, 8
        $region28: #{residual_block_forward.1} parent=11 // pred_fallthru
          _
        // Predicated region
        $region29: #{residual_block_forward.1} parent=11 // pred_check
          %p207 = pneg %p144
        $region30: #{residual_block_forward.1} parent=11 // pred_check_branch
          %209 = sbr.rel (%p207) target = $region32
        $region31: #{residual_block_forward.1} parent=11 // pred_region
          _
        $region32: #{residual_block_forward.1} parent=11 // pred_fallthru
          _
      $region12: #{residual_block_forward.1} parent=5 // pred_fallthru
        _
      %p210 = scmp.lt.s32.totalorder %s13, 2
      // Predicated region
      $region33: #{residual_block_forward.1} parent=5 // pred_check
        %p211 = pneg %p210
      $region34: #{residual_block_forward.1} parent=5 // pred_check_branch
        %213 = sbr.rel (%p211) target = $region36
      $region35: #{residual_block_forward.1} parent=5 // pred_region
        // Predicated region
        $region37: #{residual_block_forward.1} parent=35 // pred_check
          %p214 = pneg %p33
        $region38: #{residual_block_forward.1} parent=35 // pred_check_branch
          %216 = sbr.rel (%p214) target = $region40
        $region39: #{residual_block_forward.1} parent=35 // pred_region
          %p217 = scmp.lt.s32.totalorder %s13, 1
          %s218 = scalar_select %p217, %s13, 1
          %s219 = smul.addr %s218, 2
          %s220 = smul.addr %s219, 8
          %s221 = scalar_lea.vmem %s0, %s220
        $region40: #{residual_block_forward.1} parent=35 // pred_fallthru
          _
      $region36: #{residual_block_forward.1} parent=5 // pred_fallthru
        _
      %p222 = scmp.le.s32.totalorder 1, %s13
      %p223 = scmp.lt.s32.totalorder %s13, 3
      %p224 = pnand %p222, %p223
      %p225 = pneg %p224
      // Predicated region
      $region41: #{residual_block_forward.1} parent=5 // pred_check
        _
      $region42: #{residual_block_forward.1} parent=5 // pred_check_branch
        %227 = sbr.rel (%p224) target = $region44
      $region43: #{residual_block_forward.1} parent=5 // pred_region
        %s228 = ssub.s32 %s13, 1
        // Predicated region
        $region45: #{residual_block_forward.1} parent=43 // pred_check
          %p229 = pneg %p123
        $region46: #{residual_block_forward.1} parent=43 // pred_check_branch
          %231 = sbr.rel (%p229) target = $region48
        $region47: #{residual_block_forward.1} parent=43 // pred_region
          %232 = dma.done [#allocation4], 9216
        $region48: #{residual_block_forward.1} parent=43 // pred_fallthru
          _
        %p233 = scmp.lt.s32.totalorder %s18, 1
        %s234 = scalar_select %p233, %s18, 1
        %s235 = smul.addr %s234, 2
        %s236 = smul.addr %s235, 8
        %s237 = scalar_lea.vmem %s0, %s236
        %p238 = pneg %p39
        %p239 = pneg %p36
        %p240 = pneg %p60
        %p241 = pneg %p57
        %p242 = pneg %p81
        %p243 = pneg %p78
        %p244 = pneg %p102
        %p245 = pneg %p99
        %p246 = pneg %p123
        %p247 = pneg %p120
        %p248 = pneg %p144
        %p249 = pneg %p141
        %p250 = pneg %p170
        %p251 = pneg %p167
        %p252 = scmp.lt.s32.totalorder %s18, 1
        %s253 = scalar_select %p252, %s18, 1
        %s254 = smul.addr %s253, 2
        %s255 = smul.addr %s254, 8
        %s256 = scalar_lea.vmem %s6, %s255
        %p257 = scmp.lt.s32.totalorder %s18, 1
        %s258 = scalar_select %p257, %s18, 1
        %s259 = smul.addr %s258, 2
        %s260 = smul.addr %s259, 8
        %s261 = scalar_lea.vmem %s0, %s260
        %p262 = scmp.lt.s32.totalorder %s18, 1
        %s263 = scalar_select %p262, %s18, 1
        %s264 = smul.addr %s263, 2
        %s265 = smul.addr %s264, 8
        %s266 = scalar_lea.vmem %s6, %s265
        %vm267 = vcmask 588800
        %268 = vst.msk [vmem:[#allocation2] sm:$0xff] %vm267, 0.0
        %269 = vst.msk [vmem:[#allocation2 + $0x8] sm:$0xff] %vm267, 0.0
        %vm270 = vcmask 582656
        %271 = vst.msk [vmem:[#allocation2 + $0x10] sm:$0x3] %vm270, 0.0
        %v272 = vld [vmem:[%s261] sm:$0xff]
        %v273 = vld [vmem:[%s261 + $0x8] sm:$0xff]
        %v274 = vld [vmem:[%s1] sm:$0x1]
        %v275 = vlaneseq
        %v276 = vshrl.u32 %v275, 7
        %v277 = vsub.s32 0, %v276
        %v278 = vrot.slane %v274, %v277
        %v279 = vmul.f32 %v272, %v278
        %v280 = vmul.f32 %v273, %v278
        %v281 = vld [vmem:[%s1 + $0x1] sm:$0x1]
        %v282 = vlaneseq
        %v283 = vshrl.u32 %v282, 7
        %v284 = vsub.s32 0, %v283
        %v285 = vrot.slane %v281, %v284
        %v286 = vadd.f32 %v279, %v285
        %v287 = vadd.f32 %v280, %v285
        %v288 = vmax.f32 %v286, 0.0
        %v289 = vmax.f32 %v287, 0.0
        %292 = vrot.lane.b32.xlu0 %v288, 4
        %v293 = vpop.permute.xlu0 %292
        %294 = vrot.lane.b32.xlu0 %v289, 4
        %v295 = vpop.permute.xlu0 %294
        %vm298 = vcmask 556064
        %299 = vst.msk [vmem:[#allocation2 + $0x1] sm:$0xff] %vm298, %v293
        %300 = vst.msk [vmem:[#allocation2 + $0x9] sm:$0xff] %vm298, %v295
        %v301 = vld [vmem:[#allocation2] sm:$0xff]
        %v302 = vld [vmem:[#allocation2 + $0x8] sm:$0xff]
        %v303 = vld [vmem:[#allocation2 + $0x10] sm:$0x3]
        %v304 = vld [vmem:[%s2] sm:$0xff]
        %v305 = vld [vmem:[%s2 + $0x8] sm:$0xff]
        %v306 = vld [vmem:[%s2 + $0x10] sm:$0xff]
        %v307 = vld [vmem:[%s2 + $0x18] sm:$0xff]
        %v308 = vld [vmem:[%s2 + $0x20] sm:$0xff]
        %v309 = vld [vmem:[%s2 + $0x28] sm:$0xff]
        %v310 = vld [vmem:[%s2 + $0x30] sm:$0xff]
        %v311 = vld [vmem:[%s2 + $0x38] sm:$0xff]
        %s312 = scalar_lea.vmem %s2, 192
        %v313 = vld [vmem:[%s312] sm:$0xff]
        %v314 = vld [vmem:[%s312 + $0x8] sm:$0xff]
        %v315 = vld [vmem:[%s312 + $0x10] sm:$0xff]
        %v316 = vld [vmem:[%s312 + $0x18] sm:$0xff]
        %v317 = vld [vmem:[%s312 + $0x20] sm:$0xff]
        %v318 = vld [vmem:[%s312 + $0x28] sm:$0xff]
        %v319 = vld [vmem:[%s312 + $0x30] sm:$0xff]
        %v320 = vld [vmem:[%s312 + $0x38] sm:$0xff]
        %vm324 = vcmask 1046528
        %v325 = vrot.slane %v301, 1
        %v326 = vrot.slane %v302, 1
        %v327 = vsel %vm324, %v325, %v326
        %v328 = vrot.slane %v303, 1
        %v329 = vsel %vm324, %v326, %v328
        %vm330 = vcmask 523264
        %v331 = vsel %vm330, %v327, 0
        %v333 = vsel %vm330, %v329, 0
        %335 = vmatprep.subr.mxu0 0.0
        %336 = vmatpush1.msra.mxu0 0.0
        %337 = vmatprep.subr.mxu0 0.0
        %338 = vmatpush1.msra.mxu0 0.0
        %339 = vmatprep.subr.mxu0 0.0
        %340 = vmatpush1.msra.mxu0 0.0
        %341 = vmatprep.subr.mxu0 0.0
        %342 = vmatpush1.msra.mxu0 0.0
        %343 = vmatprep.subr.mxu0 0.0
        %344 = vmatpush1.msra.mxu0 0.0
        %345 = vmatprep.subr.mxu0 0.0
        %346 = vmatpush1.msra.mxu0 0.0
        %347 = vmatprep.subr.mxu0 0.0
        %348 = vmatpush1.msra.mxu0 0.0
        %349 = vmatprep.subr.mxu0 0.0
        %350 = vmatpush1.msra.mxu0 0.0
        %351 = vmatprep.subr.mxu0 0.0
        %352 = vmatpush1.msra.mxu0 %v320
        %353 = vmatprep.subr.mxu0 0.0
        %354 = vmatpush1.msra.mxu0 %v319
        %355 = vmatprep.subr.mxu0 0.0
        %356 = vmatpush1.msra.mxu0 %v318
        %357 = vmatprep.subr.mxu0 0.0
        %358 = vmatpush1.msra.mxu0 %v317
        %359 = vmatprep.subr.mxu0 0.0
        %360 = vmatpush1.msra.mxu0 %v316
        %361 = vmatprep.subr.mxu0 0.0
        %362 = vmatpush1.msra.mxu0 %v315
        %363 = vmatprep.subr.mxu0 0.0
        %364 = vmatpush1.msra.mxu0 %v314
        %365 = vmatprep.subr.mxu0 0.0
        %366 = vmatpush1.msra.mxu0 %v313
        %367 = vmatprep.subr.mxu0 0.0
        %368 = vmatpush2.msra.mxu0 0.0
        %369 = vmatprep.subr.mxu0 0.0
        %370 = vmatpush2.msra.mxu0 0.0
        %371 = vmatprep.subr.mxu0 0.0
        %372 = vmatpush2.msra.mxu0 0.0
        %373 = vmatprep.subr.mxu0 0.0
        %374 = vmatpush2.msra.mxu0 0.0
        %375 = vmatprep.subr.mxu0 0.0
        %376 = vmatpush2.msra.mxu0 0.0
        %377 = vmatprep.subr.mxu0 0.0
        %378 = vmatpush2.msra.mxu0 0.0
        %379 = vmatprep.subr.mxu0 0.0
        %380 = vmatpush2.msra.mxu0 0.0
        %381 = vmatprep.subr.mxu0 0.0
        %382 = vmatpush2.msra.mxu0 0.0
        %383 = vmatprep.subr.mxu0 0.0
        %384 = vmatpush2.msra.mxu0 0.0
        %385 = vmatprep.subr.mxu0 0.0
        %386 = vmatpush2.msra.mxu0 0.0
        %387 = vmatprep.subr.mxu0 0.0
        %388 = vmatpush2.msra.mxu0 0.0
        %389 = vmatprep.subr.mxu0 0.0
        %390 = vmatpush2.msra.mxu0 0.0
        %391 = vmatprep.subr.mxu0 0.0
        %392 = vmatpush2.msra.mxu0 0.0
        %393 = vmatprep.subr.mxu0 0.0
        %394 = vmatpush2.msra.mxu0 0.0
        %395 = vmatprep.subr.mxu0 0.0
        %396 = vmatpush2.msra.mxu0 0.0
        %397 = vmatprep.subr.mxu0 0.0
        %398 = vmatpush2.msra.mxu0 0.0
        %399 = vmatprep.mubr.f32.mxu0 0.0
        %400 = vmatmul.mubr.f32.gmra.mxu0 %v331
        %v401 = vpop.f32.mrf.mxu0
        %v402 = vadd.f32 0.0, %v401
        %v403 = vpop.f32.mrf.mxu0
        %404 = vmatprep.mubr.f32.mxu0 0.0
        %405 = vmatmul.mubr.f32.gmra.mxu0 %v333
        %v406 = vpop.f32.mrf.mxu0
        %v407 = vadd.f32 0.0, %v406
        %v408 = vpop.f32.mrf.mxu0
        %409 = vdwg.mxu0
        %v410 = vsel %vm330, %v301, 0
        %v412 = vsel %vm330, %v302, 0
        %414 = vmatprep.subr.mxu0 0.0
        %415 = vmatpush1.msra.mxu0 0.0
        %416 = vmatprep.subr.mxu0 0.0
        %417 = vmatpush1.msra.mxu0 0.0
        %418 = vmatprep.subr.mxu0 0.0
        %419 = vmatpush1.msra.mxu0 0.0
        %420 = vmatprep.subr.mxu0 0.0
        %421 = vmatpush1.msra.mxu0 0.0
        %422 = vmatprep.subr.mxu0 0.0
        %423 = vmatpush1.msra.mxu0 0.0
        %424 = vmatprep.subr.mxu0 0.0
        %425 = vmatpush1.msra.mxu0 0.0
        %426 = vmatprep.subr.mxu0 0.0
        %427 = vmatpush1.msra.mxu0 0.0
        %428 = vmatprep.subr.mxu0 0.0
        %429 = vmatpush1.msra.mxu0 0.0
        %430 = vmatprep.subr.mxu0 0.0
        %431 = vmatpush1.msra.mxu0 %v311
        %432 = vmatprep.subr.mxu0 0.0
        %433 = vmatpush1.msra.mxu0 %v310
        %434 = vmatprep.subr.mxu0 0.0
        %435 = vmatpush1.msra.mxu0 %v309
        %436 = vmatprep.subr.mxu0 0.0
        %437 = vmatpush1.msra.mxu0 %v308
        %438 = vmatprep.subr.mxu0 0.0
        %439 = vmatpush1.msra.mxu0 %v307
        %440 = vmatprep.subr.mxu0 0.0
        %441 = vmatpush1.msra.mxu0 %v306
        %442 = vmatprep.subr.mxu0 0.0
        %443 = vmatpush1.msra.mxu0 %v305
        %444 = vmatprep.subr.mxu0 0.0
        %445 = vmatpush1.msra.mxu0 %v304
        %446 = vmatprep.subr.mxu0 0.0
        %447 = vmatpush2.msra.mxu0 0.0
        %448 = vmatprep.subr.mxu0 0.0
        %449 = vmatpush2.msra.mxu0 0.0
        %450 = vmatprep.subr.mxu0 0.0
        %451 = vmatpush2.msra.mxu0 0.0
        %452 = vmatprep.subr.mxu0 0.0
        %453 = vmatpush2.msra.mxu0 0.0
        %454 = vmatprep.subr.mxu0 0.0
        %455 = vmatpush2.msra.mxu0 0.0
        %456 = vmatprep.subr.mxu0 0.0
        %457 = vmatpush2.msra.mxu0 0.0
        %458 = vmatprep.subr.mxu0 0.0
        %459 = vmatpush2.msra.mxu0 0.0
        %460 = vmatprep.subr.mxu0 0.0
        %461 = vmatpush2.msra.mxu0 0.0
        %462 = vmatprep.subr.mxu0 0.0
        %463 = vmatpush2.msra.mxu0 0.0
        %464 = vmatprep.subr.mxu0 0.0
        %465 = vmatpush2.msra.mxu0 0.0
        %466 = vmatprep.subr.mxu0 0.0
        %467 = vmatpush2.msra.mxu0 0.0
        %468 = vmatprep.subr.mxu0 0.0
        %469 = vmatpush2.msra.mxu0 0.0
        %470 = vmatprep.subr.mxu0 0.0
        %471 = vmatpush2.msra.mxu0 0.0
        %472 = vmatprep.subr.mxu0 0.0
        %473 = vmatpush2.msra.mxu0 0.0
        %474 = vmatprep.subr.mxu0 0.0
        %475 = vmatpush2.msra.mxu0 0.0
        %476 = vmatprep.subr.mxu0 0.0
        %477 = vmatpush2.msra.mxu0 0.0
        %478 = vmatprep.mubr.f32.mxu0 0.0
        %479 = vmatmul.mubr.f32.gmra.mxu0 %v410
        %v480 = vpop.f32.mrf.mxu0
        %v481 = vadd.f32 %v402, %v480
        %v482 = vpop.f32.mrf.mxu0
        %483 = vmatprep.mubr.f32.mxu0 0.0
        %484 = vmatmul.mubr.f32.gmra.mxu0 %v412
        %v485 = vpop.f32.mrf.mxu0
        %v486 = vadd.f32 %v407, %v485
        %v487 = vpop.f32.mrf.mxu0
        %488 = vdwg.mxu0
        %s489 = scalar_lea.vmem %s2, 384
        %v490 = vld [vmem:[%s489] sm:$0xff]
        %v491 = vld [vmem:[%s489 + $0x8] sm:$0xff]
        %v492 = vld [vmem:[%s489 + $0x10] sm:$0xff]
        %v493 = vld [vmem:[%s489 + $0x18] sm:$0xff]
        %v494 = vld [vmem:[%s489 + $0x20] sm:$0xff]
        %v495 = vld [vmem:[%s489 + $0x28] sm:$0xff]
        %v496 = vld [vmem:[%s489 + $0x30] sm:$0xff]
        %v497 = vld [vmem:[%s489 + $0x38] sm:$0xff]
        %vm498 = vcmask 1045504
        %v499 = vrot.slane %v301, 2
        %v500 = vrot.slane %v302, 2
        %v501 = vsel %vm498, %v499, %v500
        %v502 = vrot.slane %v303, 2
        %v503 = vsel %vm498, %v500, %v502
        %v504 = vsel %vm330, %v501, 0
        %v506 = vsel %vm330, %v503, 0
        %508 = vmatprep.subr.mxu0 0.0
        %509 = vmatpush1.msra.mxu0 0.0
        %510 = vmatprep.subr.mxu0 0.0
        %511 = vmatpush1.msra.mxu0 0.0
        %512 = vmatprep.subr.mxu0 0.0
        %513 = vmatpush1.msra.mxu0 0.0
        %514 = vmatprep.subr.mxu0 0.0
        %515 = vmatpush1.msra.mxu0 0.0
        %516 = vmatprep.subr.mxu0 0.0
        %517 = vmatpush1.msra.mxu0 0.0
        %518 = vmatprep.subr.mxu0 0.0
        %519 = vmatpush1.msra.mxu0 0.0
        %520 = vmatprep.subr.mxu0 0.0
        %521 = vmatpush1.msra.mxu0 0.0
        %522 = vmatprep.subr.mxu0 0.0
        %523 = vmatpush1.msra.mxu0 0.0
        %524 = vmatprep.subr.mxu0 0.0
        %525 = vmatpush1.msra.mxu0 %v497
        %526 = vmatprep.subr.mxu0 0.0
        %527 = vmatpush1.msra.mxu0 %v496
        %528 = vmatprep.subr.mxu0 0.0
        %529 = vmatpush1.msra.mxu0 %v495
        %530 = vmatprep.subr.mxu0 0.0
        %531 = vmatpush1.msra.mxu0 %v494
        %532 = vmatprep.subr.mxu0 0.0
        %533 = vmatpush1.msra.mxu0 %v493
        %534 = vmatprep.subr.mxu0 0.0
        %535 = vmatpush1.msra.mxu0 %v492
        %536 = vmatprep.subr.mxu0 0.0
        %537 = vmatpush1.msra.mxu0 %v491
        %538 = vmatprep.subr.mxu0 0.0
        %539 = vmatpush1.msra.mxu0 %v490
        %540 = vmatprep.subr.mxu0 0.0
        %541 = vmatpush2.msra.mxu0 0.0
        %542 = vmatprep.subr.mxu0 0.0
        %543 = vmatpush2.msra.mxu0 0.0
        %544 = vmatprep.subr.mxu0 0.0
        %545 = vmatpush2.msra.mxu0 0.0
        %546 = vmatprep.subr.mxu0 0.0
        %547 = vmatpush2.msra.mxu0 0.0
        %548 = vmatprep.subr.mxu0 0.0
        %549 = vmatpush2.msra.mxu0 0.0
        %550 = vmatprep.subr.mxu0 0.0
        %551 = vmatpush2.msra.mxu0 0.0
        %552 = vmatprep.subr.mxu0 0.0
        %553 = vmatpush2.msra.mxu0 0.0
        %554 = vmatprep.subr.mxu0 0.0
        %555 = vmatpush2.msra.mxu0 0.0
        %556 = vmatprep.subr.mxu0 0.0
        %557 = vmatpush2.msra.mxu0 0.0
        %558 = vmatprep.subr.mxu0 0.0
        %559 = vmatpush2.msra.mxu0 0.0
        %560 = vmatprep.subr.mxu0 0.0
        %561 = vmatpush2.msra.mxu0 0.0
        %562 = vmatprep.subr.mxu0 0.0
        %563 = vmatpush2.msra.mxu0 0.0
        %564 = vmatprep.subr.mxu0 0.0
        %565 = vmatpush2.msra.mxu0 0.0
        %566 = vmatprep.subr.mxu0 0.0
        %567 = vmatpush2.msra.mxu0 0.0
        %568 = vmatprep.subr.mxu0 0.0
        %569 = vmatpush2.msra.mxu0 0.0
        %570 = vmatprep.subr.mxu0 0.0
        %571 = vmatpush2.msra.mxu0 0.0
        %572 = vmatprep.mubr.f32.mxu0 0.0
        %573 = vmatmul.mubr.f32.gmra.mxu0 %v504
        %v574 = vpop.f32.mrf.mxu0
        %v575 = vadd.f32 0.0, %v574
        %v576 = vpop.f32.mrf.mxu0
        %577 = vmatprep.mubr.f32.mxu0 0.0
        %578 = vmatmul.mubr.f32.gmra.mxu0 %v506
        %v579 = vpop.f32.mrf.mxu0
        %v580 = vadd.f32 0.0, %v579
        %v581 = vpop.f32.mrf.mxu0
        %582 = vdwg.mxu0
        %v583 = vadd.f32 %v481, %v575
        %v584 = vadd.f32 %v486, %v580
        %s585 = scalar_lea.vmem %s2, 64
        %v586 = vld [vmem:[%s585] sm:$0xff]
        %v587 = vld [vmem:[%s585 + $0x8] sm:$0xff]
        %v588 = vld [vmem:[%s585 + $0x10] sm:$0xff]
        %v589 = vld [vmem:[%s585 + $0x18] sm:$0xff]
        %v590 = vld [vmem:[%s585 + $0x20] sm:$0xff]
        %v591 = vld [vmem:[%s585 + $0x28] sm:$0xff]
        %v592 = vld [vmem:[%s585 + $0x30] sm:$0xff]
        %v593 = vld [vmem:[%s585 + $0x38] sm:$0xff]
        %594 = vrot.lane.b32.xlu0 %v301, 124
        %v595 = vpop.permute.xlu0 %594
        %596 = vrot.lane.b32.xlu0 %v302, 124
        %v597 = vpop.permute.xlu0 %596
        %v598 = vsel %vm330, %v595, 0
        %v600 = vsel %vm330, %v597, 0
        %602 = vmatprep.subr.mxu0 0.0
        %603 = vmatpush1.msra.mxu0 0.0
        %604 = vmatprep.subr.mxu0 0.0
        %605 = vmatpush1.msra.mxu0 0.0
        %606 = vmatprep.subr.mxu0 0.0
        %607 = vmatpush1.msra.mxu0 0.0
        %608 = vmatprep.subr.mxu0 0.0
        %609 = vmatpush1.msra.mxu0 0.0
        %610 = vmatprep.subr.mxu0 0.0
        %611 = vmatpush1.msra.mxu0 0.0
        %612 = vmatprep.subr.mxu0 0.0
        %613 = vmatpush1.msra.mxu0 0.0
        %614 = vmatprep.subr.mxu0 0.0
        %615 = vmatpush1.msra.mxu0 0.0
        %616 = vmatprep.subr.mxu0 0.0
        %617 = vmatpush1.msra.mxu0 0.0
        %618 = vmatprep.subr.mxu0 0.0
        %619 = vmatpush1.msra.mxu0 %v593
        %620 = vmatprep.subr.mxu0 0.0
        %621 = vmatpush1.msra.mxu0 %v592
        %622 = vmatprep.subr.mxu0 0.0
        %623 = vmatpush1.msra.mxu0 %v591
        %624 = vmatprep.subr.mxu0 0.0
        %625 = vmatpush1.msra.mxu0 %v590
        %626 = vmatprep.subr.mxu0 0.0
        %627 = vmatpush1.msra.mxu0 %v589
        %628 = vmatprep.subr.mxu0 0.0
        %629 = vmatpush1.msra.mxu0 %v588
        %630 = vmatprep.subr.mxu0 0.0
        %631 = vmatpush1.msra.mxu0 %v587
        %632 = vmatprep.subr.mxu0 0.0
        %633 = vmatpush1.msra.mxu0 %v586
        %634 = vmatprep.subr.mxu0 0.0
        %635 = vmatpush2.msra.mxu0 0.0
        %636 = vmatprep.subr.mxu0 0.0
        %637 = vmatpush2.msra.mxu0 0.0
        %638 = vmatprep.subr.mxu0 0.0
        %639 = vmatpush2.msra.mxu0 0.0
        %640 = vmatprep.subr.mxu0 0.0
        %641 = vmatpush2.msra.mxu0 0.0
        %642 = vmatprep.subr.mxu0 0.0
        %643 = vmatpush2.msra.mxu0 0.0
        %644 = vmatprep.subr.mxu0 0.0
        %645 = vmatpush2.msra.mxu0 0.0
        %646 = vmatprep.subr.mxu0 0.0
        %647 = vmatpush2.msra.mxu0 0.0
        %648 = vmatprep.subr.mxu0 0.0
        %649 = vmatpush2.msra.mxu0 0.0
        %650 = vmatprep.subr.mxu0 0.0
        %651 = vmatpush2.msra.mxu0 0.0
        %652 = vmatprep.subr.mxu0 0.0
        %653 = vmatpush2.msra.mxu0 0.0
        %654 = vmatprep.subr.mxu0 0.0
        %655 = vmatpush2.msra.mxu0 0.0
        %656 = vmatprep.subr.mxu0 0.0
        %657 = vmatpush2.msra.mxu0 0.0
        %658 = vmatprep.subr.mxu0 0.0
        %659 = vmatpush2.msra.mxu0 0.0
        %660 = vmatprep.subr.mxu0 0.0
        %661 = vmatpush2.msra.mxu0 0.0
        %662 = vmatprep.subr.mxu0 0.0
        %663 = vmatpush2.msra.mxu0 0.0
        %664 = vmatprep.subr.mxu0 0.0
        %665 = vmatpush2.msra.mxu0 0.0
        %666 = vmatprep.mubr.f32.mxu0 0.0
        %667 = vmatmul.mubr.f32.gmra.mxu0 %v598
        %v668 = vpop.f32.mrf.mxu0
        %v669 = vadd.f32 0.0, %v668
        %v670 = vpop.f32.mrf.mxu0
        %671 = vmatprep.mubr.f32.mxu0 0.0
        %672 = vmatmul.mubr.f32.gmra.mxu0 %v600
        %v673 = vpop.f32.mrf.mxu0
        %v674 = vadd.f32 0.0, %v673
        %v675 = vpop.f32.mrf.mxu0
        %676 = vdwg.mxu0
        %v677 = vadd.f32 %v583, %v669
        %v678 = vadd.f32 %v584, %v674
        %s679 = scalar_lea.vmem %s2, 256
        %v680 = vld [vmem:[%s679] sm:$0xff]
        %v681 = vld [vmem:[%s679 + $0x8] sm:$0xff]
        %v682 = vld [vmem:[%s679 + $0x10] sm:$0xff]
        %v683 = vld [vmem:[%s679 + $0x18] sm:$0xff]
        %v684 = vld [vmem:[%s679 + $0x20] sm:$0xff]
        %v685 = vld [vmem:[%s679 + $0x28] sm:$0xff]
        %v686 = vld [vmem:[%s679 + $0x30] sm:$0xff]
        %v687 = vld [vmem:[%s679 + $0x38] sm:$0xff]
        %688 = vrot.lane.b32.xlu0 %v327, 124
        %v689 = vpop.permute.xlu0 %688
        %690 = vrot.lane.b32.xlu0 %v329, 124
        %v691 = vpop.permute.xlu0 %690
        %v692 = vsel %vm330, %v689, 0
        %v694 = vsel %vm330, %v691, 0
        %696 = vmatprep.subr.mxu0 0.0
        %697 = vmatpush1.msra.mxu0 0.0
        %698 = vmatprep.subr.mxu0 0.0
        %699 = vmatpush1.msra.mxu0 0.0
        %700 = vmatprep.subr.mxu0 0.0
        %701 = vmatpush1.msra.mxu0 0.0
        %702 = vmatprep.subr.mxu0 0.0
        %703 = vmatpush1.msra.mxu0 0.0
        %704 = vmatprep.subr.mxu0 0.0
        %705 = vmatpush1.msra.mxu0 0.0
        %706 = vmatprep.subr.mxu0 0.0
        %707 = vmatpush1.msra.mxu0 0.0
        %708 = vmatprep.subr.mxu0 0.0
        %709 = vmatpush1.msra.mxu0 0.0
        %710 = vmatprep.subr.mxu0 0.0
        %711 = vmatpush1.msra.mxu0 0.0
        %712 = vmatprep.subr.mxu0 0.0
        %713 = vmatpush1.msra.mxu0 %v687
        %714 = vmatprep.subr.mxu0 0.0
        %715 = vmatpush1.msra.mxu0 %v686
        %716 = vmatprep.subr.mxu0 0.0
        %717 = vmatpush1.msra.mxu0 %v685
        %718 = vmatprep.subr.mxu0 0.0
        %719 = vmatpush1.msra.mxu0 %v684
        %720 = vmatprep.subr.mxu0 0.0
        %721 = vmatpush1.msra.mxu0 %v683
        %722 = vmatprep.subr.mxu0 0.0
        %723 = vmatpush1.msra.mxu0 %v682
        %724 = vmatprep.subr.mxu0 0.0
        %725 = vmatpush1.msra.mxu0 %v681
        %726 = vmatprep.subr.mxu0 0.0
        %727 = vmatpush1.msra.mxu0 %v680
        %728 = vmatprep.subr.mxu0 0.0
        %729 = vmatpush2.msra.mxu0 0.0
        %730 = vmatprep.subr.mxu0 0.0
        %731 = vmatpush2.msra.mxu0 0.0
        %732 = vmatprep.subr.mxu0 0.0
        %733 = vmatpush2.msra.mxu0 0.0
        %734 = vmatprep.subr.mxu0 0.0
        %735 = vmatpush2.msra.mxu0 0.0
        %736 = vmatprep.subr.mxu0 0.0
        %737 = vmatpush2.msra.mxu0 0.0
        %738 = vmatprep.subr.mxu0 0.0
        %739 = vmatpush2.msra.mxu0 0.0
        %740 = vmatprep.subr.mxu0 0.0
        %741 = vmatpush2.msra.mxu0 0.0
        %742 = vmatprep.subr.mxu0 0.0
        %743 = vmatpush2.msra.mxu0 0.0
        %744 = vmatprep.subr.mxu0 0.0
        %745 = vmatpush2.msra.mxu0 0.0
        %746 = vmatprep.subr.mxu0 0.0
        %747 = vmatpush2.msra.mxu0 0.0
        %748 = vmatprep.subr.mxu0 0.0
        %749 = vmatpush2.msra.mxu0 0.0
        %750 = vmatprep.subr.mxu0 0.0
        %751 = vmatpush2.msra.mxu0 0.0
        %752 = vmatprep.subr.mxu0 0.0
        %753 = vmatpush2.msra.mxu0 0.0
        %754 = vmatprep.subr.mxu0 0.0
        %755 = vmatpush2.msra.mxu0 0.0
        %756 = vmatprep.subr.mxu0 0.0
        %757 = vmatpush2.msra.mxu0 0.0
        %758 = vmatprep.subr.mxu0 0.0
        %759 = vmatpush2.msra.mxu0 0.0
        %760 = vmatprep.mubr.f32.mxu0 0.0
        %761 = vmatmul.mubr.f32.gmra.mxu0 %v692
        %v762 = vpop.f32.mrf.mxu0
        %v763 = vadd.f32 0.0, %v762
        %v764 = vpop.f32.mrf.mxu0
        %765 = vmatprep.mubr.f32.mxu0 0.0
        %766 = vmatmul.mubr.f32.gmra.mxu0 %v694
        %v767 = vpop.f32.mrf.mxu0
        %v768 = vadd.f32 0.0, %v767
        %v769 = vpop.f32.mrf.mxu0
        %770 = vdwg.mxu0
        %v771 = vadd.f32 %v677, %v763
        %v772 = vadd.f32 %v678, %v768
        %s773 = scalar_lea.vmem %s2, 448
        %v774 = vld [vmem:[%s773] sm:$0xff]
        %v775 = vld [vmem:[%s773 + $0x8] sm:$0xff]
        %v776 = vld [vmem:[%s773 + $0x10] sm:$0xff]
        %v777 = vld [vmem:[%s773 + $0x18] sm:$0xff]
        %v778 = vld [vmem:[%s773 + $0x20] sm:$0xff]
        %v779 = vld [vmem:[%s773 + $0x28] sm:$0xff]
        %v780 = vld [vmem:[%s773 + $0x30] sm:$0xff]
        %v781 = vld [vmem:[%s773 + $0x38] sm:$0xff]
        %782 = vrot.lane.b32.xlu0 %v501, 124
        %v783 = vpop.permute.xlu0 %782
        %784 = vrot.lane.b32.xlu0 %v503, 124
        %v785 = vpop.permute.xlu0 %784
        %v786 = vsel %vm330, %v783, 0
        %v788 = vsel %vm330, %v785, 0
        %790 = vmatprep.subr.mxu0 0.0
        %791 = vmatpush1.msra.mxu0 0.0
        %792 = vmatprep.subr.mxu0 0.0
        %793 = vmatpush1.msra.mxu0 0.0
        %794 = vmatprep.subr.mxu0 0.0
        %795 = vmatpush1.msra.mxu0 0.0
        %796 = vmatprep.subr.mxu0 0.0
        %797 = vmatpush1.msra.mxu0 0.0
        %798 = vmatprep.subr.mxu0 0.0
        %799 = vmatpush1.msra.mxu0 0.0
        %800 = vmatprep.subr.mxu0 0.0
        %801 = vmatpush1.msra.mxu0 0.0
        %802 = vmatprep.subr.mxu0 0.0
        %803 = vmatpush1.msra.mxu0 0.0
        %804 = vmatprep.subr.mxu0 0.0
        %805 = vmatpush1.msra.mxu0 0.0
        %806 = vmatprep.subr.mxu0 0.0
        %807 = vmatpush1.msra.mxu0 %v781
        %808 = vmatprep.subr.mxu0 0.0
        %809 = vmatpush1.msra.mxu0 %v780
        %810 = vmatprep.subr.mxu0 0.0
        %811 = vmatpush1.msra.mxu0 %v779
        %812 = vmatprep.subr.mxu0 0.0
        %813 = vmatpush1.msra.mxu0 %v778
        %814 = vmatprep.subr.mxu0 0.0
        %815 = vmatpush1.msra.mxu0 %v777
        %816 = vmatprep.subr.mxu0 0.0
        %817 = vmatpush1.msra.mxu0 %v776
        %818 = vmatprep.subr.mxu0 0.0
        %819 = vmatpush1.msra.mxu0 %v775
        %820 = vmatprep.subr.mxu0 0.0
        %821 = vmatpush1.msra.mxu0 %v774
        %822 = vmatprep.subr.mxu0 0.0
        %823 = vmatpush2.msra.mxu0 0.0
        %824 = vmatprep.subr.mxu0 0.0
        %825 = vmatpush2.msra.mxu0 0.0
        %826 = vmatprep.subr.mxu0 0.0
        %827 = vmatpush2.msra.mxu0 0.0
        %828 = vmatprep.subr.mxu0 0.0
        %829 = vmatpush2.msra.mxu0 0.0
        %830 = vmatprep.subr.mxu0 0.0
        %831 = vmatpush2.msra.mxu0 0.0
        %832 = vmatprep.subr.mxu0 0.0
        %833 = vmatpush2.msra.mxu0 0.0
        %834 = vmatprep.subr.mxu0 0.0
        %835 = vmatpush2.msra.mxu0 0.0
        %836 = vmatprep.subr.mxu0 0.0
        %837 = vmatpush2.msra.mxu0 0.0
        %838 = vmatprep.subr.mxu0 0.0
        %839 = vmatpush2.msra.mxu0 0.0
        %840 = vmatprep.subr.mxu0 0.0
        %841 = vmatpush2.msra.mxu0 0.0
        %842 = vmatprep.subr.mxu0 0.0
        %843 = vmatpush2.msra.mxu0 0.0
        %844 = vmatprep.subr.mxu0 0.0
        %845 = vmatpush2.msra.mxu0 0.0
        %846 = vmatprep.subr.mxu0 0.0
        %847 = vmatpush2.msra.mxu0 0.0
        %848 = vmatprep.subr.mxu0 0.0
        %849 = vmatpush2.msra.mxu0 0.0
        %850 = vmatprep.subr.mxu0 0.0
        %851 = vmatpush2.msra.mxu0 0.0
        %852 = vmatprep.subr.mxu0 0.0
        %853 = vmatpush2.msra.mxu0 0.0
        %854 = vmatprep.mubr.f32.mxu0 0.0
        %855 = vmatmul.mubr.f32.gmra.mxu0 %v786
        %v856 = vpop.f32.mrf.mxu0
        %v857 = vadd.f32 0.0, %v856
        %v858 = vpop.f32.mrf.mxu0
        %859 = vmatprep.mubr.f32.mxu0 0.0
        %860 = vmatmul.mubr.f32.gmra.mxu0 %v788
        %v861 = vpop.f32.mrf.mxu0
        %v862 = vadd.f32 0.0, %v861
        %v863 = vpop.f32.mrf.mxu0
        %864 = vdwg.mxu0
        %v865 = vadd.f32 %v771, %v857
        %v866 = vadd.f32 %v772, %v862
        %s867 = scalar_lea.vmem %s2, 128
        %v868 = vld [vmem:[%s867] sm:$0xff]
        %v869 = vld [vmem:[%s867 + $0x8] sm:$0xff]
        %v870 = vld [vmem:[%s867 + $0x10] sm:$0xff]
        %v871 = vld [vmem:[%s867 + $0x18] sm:$0xff]
        %v872 = vld [vmem:[%s867 + $0x20] sm:$0xff]
        %v873 = vld [vmem:[%s867 + $0x28] sm:$0xff]
        %v874 = vld [vmem:[%s867 + $0x30] sm:$0xff]
        %v875 = vld [vmem:[%s867 + $0x38] sm:$0xff]
        %876 = vrot.lane.b32.xlu0 %v301, 120
        %v877 = vpop.permute.xlu0 %876
        %878 = vrot.lane.b32.xlu0 %v302, 120
        %v879 = vpop.permute.xlu0 %878
        %v880 = vsel %vm330, %v877, 0
        %v882 = vsel %vm330, %v879, 0
        %884 = vmatprep.subr.mxu0 0.0
        %885 = vmatpush1.msra.mxu0 0.0
        %886 = vmatprep.subr.mxu0 0.0
        %887 = vmatpush1.msra.mxu0 0.0
        %888 = vmatprep.subr.mxu0 0.0
        %889 = vmatpush1.msra.mxu0 0.0
        %890 = vmatprep.subr.mxu0 0.0
        %891 = vmatpush1.msra.mxu0 0.0
        %892 = vmatprep.subr.mxu0 0.0
        %893 = vmatpush1.msra.mxu0 0.0
        %894 = vmatprep.subr.mxu0 0.0
        %895 = vmatpush1.msra.mxu0 0.0
        %896 = vmatprep.subr.mxu0 0.0
        %897 = vmatpush1.msra.mxu0 0.0
        %898 = vmatprep.subr.mxu0 0.0
        %899 = vmatpush1.msra.mxu0 0.0
        %900 = vmatprep.subr.mxu0 0.0
        %901 = vmatpush1.msra.mxu0 %v875
        %902 = vmatprep.subr.mxu0 0.0
        %903 = vmatpush1.msra.mxu0 %v874
        %904 = vmatprep.subr.mxu0 0.0
        %905 = vmatpush1.msra.mxu0 %v873
        %906 = vmatprep.subr.mxu0 0.0
        %907 = vmatpush1.msra.mxu0 %v872
        %908 = vmatprep.subr.mxu0 0.0
        %909 = vmatpush1.msra.mxu0 %v871
        %910 = vmatprep.subr.mxu0 0.0
        %911 = vmatpush1.msra.mxu0 %v870
        %912 = vmatprep.subr.mxu0 0.0
        %913 = vmatpush1.msra.mxu0 %v869
        %914 = vmatprep.subr.mxu0 0.0
        %915 = vmatpush1.msra.mxu0 %v868
        %916 = vmatprep.subr.mxu0 0.0
        %917 = vmatpush2.msra.mxu0 0.0
        %918 = vmatprep.subr.mxu0 0.0
        %919 = vmatpush2.msra.mxu0 0.0
        %920 = vmatprep.subr.mxu0 0.0
        %921 = vmatpush2.msra.mxu0 0.0
        %922 = vmatprep.subr.mxu0 0.0
        %923 = vmatpush2.msra.mxu0 0.0
        %924 = vmatprep.subr.mxu0 0.0
        %925 = vmatpush2.msra.mxu0 0.0
        %926 = vmatprep.subr.mxu0 0.0
        %927 = vmatpush2.msra.mxu0 0.0
        %928 = vmatprep.subr.mxu0 0.0
        %929 = vmatpush2.msra.mxu0 0.0
        %930 = vmatprep.subr.mxu0 0.0
        %931 = vmatpush2.msra.mxu0 0.0
        %932 = vmatprep.subr.mxu0 0.0
        %933 = vmatpush2.msra.mxu0 0.0
        %934 = vmatprep.subr.mxu0 0.0
        %935 = vmatpush2.msra.mxu0 0.0
        %936 = vmatprep.subr.mxu0 0.0
        %937 = vmatpush2.msra.mxu0 0.0
        %938 = vmatprep.subr.mxu0 0.0
        %939 = vmatpush2.msra.mxu0 0.0
        %940 = vmatprep.subr.mxu0 0.0
        %941 = vmatpush2.msra.mxu0 0.0
        %942 = vmatprep.subr.mxu0 0.0
        %943 = vmatpush2.msra.mxu0 0.0
        %944 = vmatprep.subr.mxu0 0.0
        %945 = vmatpush2.msra.mxu0 0.0
        %946 = vmatprep.subr.mxu0 0.0
        %947 = vmatpush2.msra.mxu0 0.0
        %948 = vmatprep.mubr.f32.mxu0 0.0
        %949 = vmatmul.mubr.f32.gmra.mxu0 %v880
        %v950 = vpop.f32.mrf.mxu0
        %v951 = vadd.f32 0.0, %v950
        %v952 = vpop.f32.mrf.mxu0
        %953 = vmatprep.mubr.f32.mxu0 0.0
        %954 = vmatmul.mubr.f32.gmra.mxu0 %v882
        %v955 = vpop.f32.mrf.mxu0
        %v956 = vadd.f32 0.0, %v955
        %v957 = vpop.f32.mrf.mxu0
        %958 = vdwg.mxu0
        %v959 = vadd.f32 %v865, %v951
        %v960 = vadd.f32 %v866, %v956
        %s961 = scalar_lea.vmem %s2, 320
        %v962 = vld [vmem:[%s961] sm:$0xff]
        %v963 = vld [vmem:[%s961 + $0x8] sm:$0xff]
        %v964 = vld [vmem:[%s961 + $0x10] sm:$0xff]
        %v965 = vld [vmem:[%s961 + $0x18] sm:$0xff]
        %v966 = vld [vmem:[%s961 + $0x20] sm:$0xff]
        %v967 = vld [vmem:[%s961 + $0x28] sm:$0xff]
        %v968 = vld [vmem:[%s961 + $0x30] sm:$0xff]
        %v969 = vld [vmem:[%s961 + $0x38] sm:$0xff]
        %970 = vrot.lane.b32.xlu0 %v327, 120
        %v971 = vpop.permute.xlu0 %970
        %972 = vrot.lane.b32.xlu0 %v329, 120
        %v973 = vpop.permute.xlu0 %972
        %v974 = vsel %vm330, %v971, 0
        %v976 = vsel %vm330, %v973, 0
        %978 = vmatprep.subr.mxu0 0.0
        %979 = vmatpush1.msra.mxu0 0.0
        %980 = vmatprep.subr.mxu0 0.0
        %981 = vmatpush1.msra.mxu0 0.0
        %982 = vmatprep.subr.mxu0 0.0
        %983 = vmatpush1.msra.mxu0 0.0
        %984 = vmatprep.subr.mxu0 0.0
        %985 = vmatpush1.msra.mxu0 0.0
        %986 = vmatprep.subr.mxu0 0.0
        %987 = vmatpush1.msra.mxu0 0.0
        %988 = vmatprep.subr.mxu0 0.0
        %989 = vmatpush1.msra.mxu0 0.0
        %990 = vmatprep.subr.mxu0 0.0
        %991 = vmatpush1.msra.mxu0 0.0
        %992 = vmatprep.subr.mxu0 0.0
        %993 = vmatpush1.msra.mxu0 0.0
        %994 = vmatprep.subr.mxu0 0.0
        %995 = vmatpush1.msra.mxu0 %v969
        %996 = vmatprep.subr.mxu0 0.0
        %997 = vmatpush1.msra.mxu0 %v968
        %998 = vmatprep.subr.mxu0 0.0
        %999 = vmatpush1.msra.mxu0 %v967
        %1000 = vmatprep.subr.mxu0 0.0
        %1001 = vmatpush1.msra.mxu0 %v966
        %1002 = vmatprep.subr.mxu0 0.0
        %1003 = vmatpush1.msra.mxu0 %v965
        %1004 = vmatprep.subr.mxu0 0.0
        %1005 = vmatpush1.msra.mxu0 %v964
        %1006 = vmatprep.subr.mxu0 0.0
        %1007 = vmatpush1.msra.mxu0 %v963
        %1008 = vmatprep.subr.mxu0 0.0
        %1009 = vmatpush1.msra.mxu0 %v962
        %1010 = vmatprep.subr.mxu0 0.0
        %1011 = vmatpush2.msra.mxu0 0.0
        %1012 = vmatprep.subr.mxu0 0.0
        %1013 = vmatpush2.msra.mxu0 0.0
        %1014 = vmatprep.subr.mxu0 0.0
        %1015 = vmatpush2.msra.mxu0 0.0
        %1016 = vmatprep.subr.mxu0 0.0
        %1017 = vmatpush2.msra.mxu0 0.0
        %1018 = vmatprep.subr.mxu0 0.0
        %1019 = vmatpush2.msra.mxu0 0.0
        %1020 = vmatprep.subr.mxu0 0.0
        %1021 = vmatpush2.msra.mxu0 0.0
        %1022 = vmatprep.subr.mxu0 0.0
        %1023 = vmatpush2.msra.mxu0 0.0
        %1024 = vmatprep.subr.mxu0 0.0
        %1025 = vmatpush2.msra.mxu0 0.0
        %1026 = vmatprep.subr.mxu0 0.0
        %1027 = vmatpush2.msra.mxu0 0.0
        %1028 = vmatprep.subr.mxu0 0.0
        %1029 = vmatpush2.msra.mxu0 0.0
        %1030 = vmatprep.subr.mxu0 0.0
        %1031 = vmatpush2.msra.mxu0 0.0
        %1032 = vmatprep.subr.mxu0 0.0
        %1033 = vmatpush2.msra.mxu0 0.0
        %1034 = vmatprep.subr.mxu0 0.0
        %1035 = vmatpush2.msra.mxu0 0.0
        %1036 = vmatprep.subr.mxu0 0.0
        %1037 = vmatpush2.msra.mxu0 0.0
        %1038 = vmatprep.subr.mxu0 0.0
        %1039 = vmatpush2.msra.mxu0 0.0
        %1040 = vmatprep.subr.mxu0 0.0
        %1041 = vmatpush2.msra.mxu0 0.0
        %1042 = vmatprep.mubr.f32.mxu0 0.0
        %1043 = vmatmul.mubr.f32.gmra.mxu0 %v974
        %v1044 = vpop.f32.mrf.mxu0
        %v1045 = vadd.f32 0.0, %v1044
        %v1046 = vpop.f32.mrf.mxu0
        %1047 = vmatprep.mubr.f32.mxu0 0.0
        %1048 = vmatmul.mubr.f32.gmra.mxu0 %v976
        %v1049 = vpop.f32.mrf.mxu0
        %v1050 = vadd.f32 0.0, %v1049
        %v1051 = vpop.f32.mrf.mxu0
        %1052 = vdwg.mxu0
        %v1053 = vadd.f32 %v959, %v1045
        %v1054 = vadd.f32 %v960, %v1050
        %s1055 = scalar_lea.vmem %s2, 512
        %v1056 = vld [vmem:[%s1055] sm:$0xff]
        %v1057 = vld [vmem:[%s1055 + $0x8] sm:$0xff]
        %v1058 = vld [vmem:[%s1055 + $0x10] sm:$0xff]
        %v1059 = vld [vmem:[%s1055 + $0x18] sm:$0xff]
        %v1060 = vld [vmem:[%s1055 + $0x20] sm:$0xff]
        %v1061 = vld [vmem:[%s1055 + $0x28] sm:$0xff]
        %v1062 = vld [vmem:[%s1055 + $0x30] sm:$0xff]
        %v1063 = vld [vmem:[%s1055 + $0x38] sm:$0xff]
        %1064 = vrot.lane.b32.xlu0 %v501, 120
        %v1065 = vpop.permute.xlu0 %1064
        %1066 = vrot.lane.b32.xlu0 %v503, 120
        %v1067 = vpop.permute.xlu0 %1066
        %v1068 = vsel %vm330, %v1065, 0
        %v1070 = vsel %vm330, %v1067, 0
        %1072 = vmatprep.subr.mxu0 0.0
        %1073 = vmatpush1.msra.mxu0 0.0
        %1074 = vmatprep.subr.mxu0 0.0
        %1075 = vmatpush1.msra.mxu0 0.0
        %1076 = vmatprep.subr.mxu0 0.0
        %1077 = vmatpush1.msra.mxu0 0.0
        %1078 = vmatprep.subr.mxu0 0.0
        %1079 = vmatpush1.msra.mxu0 0.0
        %1080 = vmatprep.subr.mxu0 0.0
        %1081 = vmatpush1.msra.mxu0 0.0
        %1082 = vmatprep.subr.mxu0 0.0
        %1083 = vmatpush1.msra.mxu0 0.0
        %1084 = vmatprep.subr.mxu0 0.0
        %1085 = vmatpush1.msra.mxu0 0.0
        %1086 = vmatprep.subr.mxu0 0.0
        %1087 = vmatpush1.msra.mxu0 0.0
        %1088 = vmatprep.subr.mxu0 0.0
        %1089 = vmatpush1.msra.mxu0 %v1063
        %1090 = vmatprep.subr.mxu0 0.0
        %1091 = vmatpush1.msra.mxu0 %v1062
        %1092 = vmatprep.subr.mxu0 0.0
        %1093 = vmatpush1.msra.mxu0 %v1061
        %1094 = vmatprep.subr.mxu0 0.0
        %1095 = vmatpush1.msra.mxu0 %v1060
        %1096 = vmatprep.subr.mxu0 0.0
        %1097 = vmatpush1.msra.mxu0 %v1059
        %1098 = vmatprep.subr.mxu0 0.0
        %1099 = vmatpush1.msra.mxu0 %v1058
        %1100 = vmatprep.subr.mxu0 0.0
        %1101 = vmatpush1.msra.mxu0 %v1057
        %1102 = vmatprep.subr.mxu0 0.0
        %1103 = vmatpush1.msra.mxu0 %v1056
        %1104 = vmatprep.subr.mxu0 0.0
        %1105 = vmatpush2.msra.mxu0 0.0
        %1106 = vmatprep.subr.mxu0 0.0
        %1107 = vmatpush2.msra.mxu0 0.0
        %1108 = vmatprep.subr.mxu0 0.0
        %1109 = vmatpush2.msra.mxu0 0.0
        %1110 = vmatprep.subr.mxu0 0.0
        %1111 = vmatpush2.msra.mxu0 0.0
        %1112 = vmatprep.subr.mxu0 0.0
        %1113 = vmatpush2.msra.mxu0 0.0
        %1114 = vmatprep.subr.mxu0 0.0
        %1115 = vmatpush2.msra.mxu0 0.0
        %1116 = vmatprep.subr.mxu0 0.0
        %1117 = vmatpush2.msra.mxu0 0.0
        %1118 = vmatprep.subr.mxu0 0.0
        %1119 = vmatpush2.msra.mxu0 0.0
        %1120 = vmatprep.subr.mxu0 0.0
        %1121 = vmatpush2.msra.mxu0 0.0
        %1122 = vmatprep.subr.mxu0 0.0
        %1123 = vmatpush2.msra.mxu0 0.0
        %1124 = vmatprep.subr.mxu0 0.0
        %1125 = vmatpush2.msra.mxu0 0.0
        %1126 = vmatprep.subr.mxu0 0.0
        %1127 = vmatpush2.msra.mxu0 0.0
        %1128 = vmatprep.subr.mxu0 0.0
        %1129 = vmatpush2.msra.mxu0 0.0
        %1130 = vmatprep.subr.mxu0 0.0
        %1131 = vmatpush2.msra.mxu0 0.0
        %1132 = vmatprep.subr.mxu0 0.0
        %1133 = vmatpush2.msra.mxu0 0.0
        %1134 = vmatprep.subr.mxu0 0.0
        %1135 = vmatpush2.msra.mxu0 0.0
        %1136 = vmatprep.mubr.f32.mxu0 0.0
        %1137 = vmatmul.mubr.f32.gmra.mxu0 %v1068
        %v1138 = vpop.f32.mrf.mxu0
        %v1139 = vadd.f32 0.0, %v1138
        %v1140 = vpop.f32.mrf.mxu0
        %1141 = vmatprep.mubr.f32.mxu0 0.0
        %1142 = vmatmul.mubr.f32.gmra.mxu0 %v1070
        %v1143 = vpop.f32.mrf.mxu0
        %v1144 = vadd.f32 0.0, %v1143
        %v1145 = vpop.f32.mrf.mxu0
        %1146 = vdwg.mxu0
        %v1147 = vadd.f32 %v1053, %v1139
        %v1148 = vadd.f32 %v1054, %v1144
        %v1149 = vsel %vm330, %v1147, 0.0
        %1150 = vadd.xlane.f32.xlu0 %v1149
        %v1151 = vpop.xlane.xlu0 %1150
        %v1152 = vsel %vm330, %v1148, 0.0
        %1153 = vadd.xlane.f32.xlu0 %v1152
        %v1154 = vpop.xlane.xlu0 %1153
        %v1155 = vadd.f32 %v1151, %v1154
        %v1156 = vrot.slane %v1155, 4
        %v1157 = vadd.f32 %v1155, %v1156
        %v1158 = vrot.slane %v1157, 2
        %v1159 = vadd.f32 %v1157, %v1158
        %v1160 = vrot.slane %v1159, 1
        %v1161 = vadd.f32 %v1159, %v1160
        %v1162 = vrcp.pop 1024.0
        %v1163 = vmul.f32 %v1161, %v1162
        %v1164 = vsub.f32 %v1147, %v1163
        %v1165 = vsub.f32 %v1148, %v1163
        %v1166 = vmul.f32 %v1164, %v1164
        %v1167 = vmul.f32 %v1165, %v1165
        %v1168 = vsel %vm330, %v1166, 0.0
        %1169 = vadd.xlane.f32.xlu0 %v1168
        %v1170 = vpop.xlane.xlu0 %1169
        %v1171 = vsel %vm330, %v1167, 0.0
        %1172 = vadd.xlane.f32.xlu0 %v1171
        %v1173 = vpop.xlane.xlu0 %1172
        %v1174 = vadd.f32 %v1170, %v1173
        %v1175 = vrot.slane %v1174, 4
        %v1176 = vadd.f32 %v1174, %v1175
        %v1177 = vrot.slane %v1176, 2
        %v1178 = vadd.f32 %v1176, %v1177
        %v1179 = vrot.slane %v1178, 1
        %v1180 = vadd.f32 %v1178, %v1179
        %v1181 = vmul.f32 %v1180, %v1162
        %v1182 = vadd.f32 %v1181, 1e-05
        %v1183 = vrsqrt.pop %v1182
        %v1184 = vmul.f32 %v1164, %v1183
        %v1185 = vmul.f32 %v1165, %v1183
        %v1186 = vld [vmem:[%s3] sm:$0xff]
        %v1187 = vld [vmem:[%s3 + $0x8] sm:$0xff]
        %v1188 = vmul.f32 %v1184, %v1186
        %v1189 = vmul.f32 %v1185, %v1187
        %s1190 = scalar_lea.vmem %s3, 16
        %v1191 = vld [vmem:[%s1190] sm:$0xff]
        %v1192 = vld [vmem:[%s1190 + $0x8] sm:$0xff]
        %v1193 = vadd.f32 %v1188, %v1191
        %v1194 = vadd.f32 %v1189, %v1192
        %v1195 = vmax.f32 %v1193, 0.0
        %v1196 = vmax.f32 %v1194, 0.0
        %1199 = vrot.lane.b32.xlu0 %v1195, 4
        %v1200 = vpop.permute.xlu0 %1199
        %1201 = vrot.lane.b32.xlu0 %v1196, 4
        %v1202 = vpop.permute.xlu0 %1201
        %1205 = vst.msk [vmem:[#allocation2 + $0x1] sm:$0xff] %vm298, %v1200
        %1206 = vst.msk [vmem:[#allocation2 + $0x9] sm:$0xff] %vm298, %v1202
        %v1207 = vld [vmem:[#allocation2] sm:$0xff]
        %v1208 = vld [vmem:[#allocation2 + $0x8] sm:$0xff]
        %v1209 = vld [vmem:[#allocation2 + $0x10] sm:$0x3]
        %v1210 = vld [vmem:[#allocation3] sm:$0xff]
        %v1211 = vld [vmem:[#allocation3 + $0x8] sm:$0xff]
        %v1212 = vld [vmem:[#allocation3 + $0x10] sm:$0xff]
        %v1213 = vld [vmem:[#allocation3 + $0x18] sm:$0xff]
        %v1214 = vld [vmem:[#allocation3 + $0x20] sm:$0xff]
        %v1215 = vld [vmem:[#allocation3 + $0x28] sm:$0xff]
        %v1216 = vld [vmem:[#allocation3 + $0x30] sm:$0xff]
        %v1217 = vld [vmem:[#allocation3 + $0x38] sm:$0xff]
        %s1218 = scalar_lea.vmem [#allocation3], 192
        %v1219 = vld [vmem:[%s1218] sm:$0xff]
        %v1220 = vld [vmem:[%s1218 + $0x8] sm:$0xff]
        %v1221 = vld [vmem:[%s1218 + $0x10] sm:$0xff]
        %v1222 = vld [vmem:[%s1218 + $0x18] sm:$0xff]
        %v1223 = vld [vmem:[%s1218 + $0x20] sm:$0xff]
        %v1224 = vld [vmem:[%s1218 + $0x28] sm:$0xff]
        %v1225 = vld [vmem:[%s1218 + $0x30] sm:$0xff]
        %v1226 = vld [vmem:[%s1218 + $0x38] sm:$0xff]
        %v1230 = vrot.slane %v1207, 1
        %v1231 = vrot.slane %v1208, 1
        %v1232 = vsel %vm324, %v1230, %v1231
        %v1233 = vrot.slane %v1209, 1
        %v1234 = vsel %vm324, %v1231, %v1233
        %v1235 = vsel %vm330, %v1232, 0
        %v1237 = vsel %vm330, %v1234, 0
        %1239 = vmatprep.subr.mxu0 0.0
        %1240 = vmatpush1.msra.mxu0 0.0
        %1241 = vmatprep.subr.mxu0 0.0
        %1242 = vmatpush1.msra.mxu0 0.0
        %1243 = vmatprep.subr.mxu0 0.0
        %1244 = vmatpush1.msra.mxu0 0.0
        %1245 = vmatprep.subr.mxu0 0.0
        %1246 = vmatpush1.msra.mxu0 0.0
        %1247 = vmatprep.subr.mxu0 0.0
        %1248 = vmatpush1.msra.mxu0 0.0
        %1249 = vmatprep.subr.mxu0 0.0
        %1250 = vmatpush1.msra.mxu0 0.0
        %1251 = vmatprep.subr.mxu0 0.0
        %1252 = vmatpush1.msra.mxu0 0.0
        %1253 = vmatprep.subr.mxu0 0.0
        %1254 = vmatpush1.msra.mxu0 0.0
        %1255 = vmatprep.subr.mxu0 0.0
        %1256 = vmatpush1.msra.mxu0 %v1226
        %1257 = vmatprep.subr.mxu0 0.0
        %1258 = vmatpush1.msra.mxu0 %v1225
        %1259 = vmatprep.subr.mxu0 0.0
        %1260 = vmatpush1.msra.mxu0 %v1224
        %1261 = vmatprep.subr.mxu0 0.0
        %1262 = vmatpush1.msra.mxu0 %v1223
        %1263 = vmatprep.subr.mxu0 0.0
        %1264 = vmatpush1.msra.mxu0 %v1222
        %1265 = vmatprep.subr.mxu0 0.0
        %1266 = vmatpush1.msra.mxu0 %v1221
        %1267 = vmatprep.subr.mxu0 0.0
        %1268 = vmatpush1.msra.mxu0 %v1220
        %1269 = vmatprep.subr.mxu0 0.0
        %1270 = vmatpush1.msra.mxu0 %v1219
        %1271 = vmatprep.subr.mxu0 0.0
        %1272 = vmatpush2.msra.mxu0 0.0
        %1273 = vmatprep.subr.mxu0 0.0
        %1274 = vmatpush2.msra.mxu0 0.0
        %1275 = vmatprep.subr.mxu0 0.0
        %1276 = vmatpush2.msra.mxu0 0.0
        %1277 = vmatprep.subr.mxu0 0.0
        %1278 = vmatpush2.msra.mxu0 0.0
        %1279 = vmatprep.subr.mxu0 0.0
        %1280 = vmatpush2.msra.mxu0 0.0
        %1281 = vmatprep.subr.mxu0 0.0
        %1282 = vmatpush2.msra.mxu0 0.0
        %1283 = vmatprep.subr.mxu0 0.0
        %1284 = vmatpush2.msra.mxu0 0.0
        %1285 = vmatprep.subr.mxu0 0.0
        %1286 = vmatpush2.msra.mxu0 0.0
        %1287 = vmatprep.subr.mxu0 0.0
        %1288 = vmatpush2.msra.mxu0 0.0
        %1289 = vmatprep.subr.mxu0 0.0
        %1290 = vmatpush2.msra.mxu0 0.0
        %1291 = vmatprep.subr.mxu0 0.0
        %1292 = vmatpush2.msra.mxu0 0.0
        %1293 = vmatprep.subr.mxu0 0.0
        %1294 = vmatpush2.msra.mxu0 0.0
        %1295 = vmatprep.subr.mxu0 0.0
        %1296 = vmatpush2.msra.mxu0 0.0
        %1297 = vmatprep.subr.mxu0 0.0
        %1298 = vmatpush2.msra.mxu0 0.0
        %1299 = vmatprep.subr.mxu0 0.0
        %1300 = vmatpush2.msra.mxu0 0.0
        %1301 = vmatprep.subr.mxu0 0.0
        %1302 = vmatpush2.msra.mxu0 0.0
        %1303 = vmatprep.mubr.f32.mxu0 0.0
        %1304 = vmatmul.mubr.f32.gmra.mxu0 %v1235
        %v1305 = vpop.f32.mrf.mxu0
        %v1306 = vadd.f32 0.0, %v1305
        %v1307 = vpop.f32.mrf.mxu0
        %1308 = vmatprep.mubr.f32.mxu0 0.0
        %1309 = vmatmul.mubr.f32.gmra.mxu0 %v1237
        %v1310 = vpop.f32.mrf.mxu0
        %v1311 = vadd.f32 0.0, %v1310
        %v1312 = vpop.f32.mrf.mxu0
        %1313 = vdwg.mxu0
        %v1314 = vsel %vm330, %v1207, 0
        %v1316 = vsel %vm330, %v1208, 0
        %1318 = vmatprep.subr.mxu0 0.0
        %1319 = vmatpush1.msra.mxu0 0.0
        %1320 = vmatprep.subr.mxu0 0.0
        %1321 = vmatpush1.msra.mxu0 0.0
        %1322 = vmatprep.subr.mxu0 0.0
        %1323 = vmatpush1.msra.mxu0 0.0
        %1324 = vmatprep.subr.mxu0 0.0
        %1325 = vmatpush1.msra.mxu0 0.0
        %1326 = vmatprep.subr.mxu0 0.0
        %1327 = vmatpush1.msra.mxu0 0.0
        %1328 = vmatprep.subr.mxu0 0.0
        %1329 = vmatpush1.msra.mxu0 0.0
        %1330 = vmatprep.subr.mxu0 0.0
        %1331 = vmatpush1.msra.mxu0 0.0
        %1332 = vmatprep.subr.mxu0 0.0
        %1333 = vmatpush1.msra.mxu0 0.0
        %1334 = vmatprep.subr.mxu0 0.0
        %1335 = vmatpush1.msra.mxu0 %v1217
        %1336 = vmatprep.subr.mxu0 0.0
        %1337 = vmatpush1.msra.mxu0 %v1216
        %1338 = vmatprep.subr.mxu0 0.0
        %1339 = vmatpush1.msra.mxu0 %v1215
        %1340 = vmatprep.subr.mxu0 0.0
        %1341 = vmatpush1.msra.mxu0 %v1214
        %1342 = vmatprep.subr.mxu0 0.0
        %1343 = vmatpush1.msra.mxu0 %v1213
        %1344 = vmatprep.subr.mxu0 0.0
        %1345 = vmatpush1.msra.mxu0 %v1212
        %1346 = vmatprep.subr.mxu0 0.0
        %1347 = vmatpush1.msra.mxu0 %v1211
        %1348 = vmatprep.subr.mxu0 0.0
        %1349 = vmatpush1.msra.mxu0 %v1210
        %1350 = vmatprep.subr.mxu0 0.0
        %1351 = vmatpush2.msra.mxu0 0.0
        %1352 = vmatprep.subr.mxu0 0.0
        %1353 = vmatpush2.msra.mxu0 0.0
        %1354 = vmatprep.subr.mxu0 0.0
        %1355 = vmatpush2.msra.mxu0 0.0
        %1356 = vmatprep.subr.mxu0 0.0
        %1357 = vmatpush2.msra.mxu0 0.0
        %1358 = vmatprep.subr.mxu0 0.0
        %1359 = vmatpush2.msra.mxu0 0.0
        %1360 = vmatprep.subr.mxu0 0.0
        %1361 = vmatpush2.msra.mxu0 0.0
        %1362 = vmatprep.subr.mxu0 0.0
        %1363 = vmatpush2.msra.mxu0 0.0
        %1364 = vmatprep.subr.mxu0 0.0
        %1365 = vmatpush2.msra.mxu0 0.0
        %1366 = vmatprep.subr.mxu0 0.0
        %1367 = vmatpush2.msra.mxu0 0.0
        %1368 = vmatprep.subr.mxu0 0.0
        %1369 = vmatpush2.msra.mxu0 0.0
        %1370 = vmatprep.subr.mxu0 0.0
        %1371 = vmatpush2.msra.mxu0 0.0
        %1372 = vmatprep.subr.mxu0 0.0
        %1373 = vmatpush2.msra.mxu0 0.0
        %1374 = vmatprep.subr.mxu0 0.0
        %1375 = vmatpush2.msra.mxu0 0.0
        %1376 = vmatprep.subr.mxu0 0.0
        %1377 = vmatpush2.msra.mxu0 0.0
        %1378 = vmatprep.subr.mxu0 0.0
        %1379 = vmatpush2.msra.mxu0 0.0
        %1380 = vmatprep.subr.mxu0 0.0
        %1381 = vmatpush2.msra.mxu0 0.0
        %1382 = vmatprep.mubr.f32.mxu0 0.0
        %1383 = vmatmul.mubr.f32.gmra.mxu0 %v1314
        %v1384 = vpop.f32.mrf.mxu0
        %v1385 = vadd.f32 %v1306, %v1384
        %v1386 = vpop.f32.mrf.mxu0
        %1387 = vmatprep.mubr.f32.mxu0 0.0
        %1388 = vmatmul.mubr.f32.gmra.mxu0 %v1316
        %v1389 = vpop.f32.mrf.mxu0
        %v1390 = vadd.f32 %v1311, %v1389
        %v1391 = vpop.f32.mrf.mxu0
        %1392 = vdwg.mxu0
        %s1393 = scalar_lea.vmem [#allocation3], 384
        %v1394 = vld [vmem:[%s1393] sm:$0xff]
        %v1395 = vld [vmem:[%s1393 + $0x8] sm:$0xff]
        %v1396 = vld [vmem:[%s1393 + $0x10] sm:$0xff]
        %v1397 = vld [vmem:[%s1393 + $0x18] sm:$0xff]
        %v1398 = vld [vmem:[%s1393 + $0x20] sm:$0xff]
        %v1399 = vld [vmem:[%s1393 + $0x28] sm:$0xff]
        %v1400 = vld [vmem:[%s1393 + $0x30] sm:$0xff]
        %v1401 = vld [vmem:[%s1393 + $0x38] sm:$0xff]
        %v1402 = vrot.slane %v1207, 2
        %v1403 = vrot.slane %v1208, 2
        %v1404 = vsel %vm498, %v1402, %v1403
        %v1405 = vrot.slane %v1209, 2
        %v1406 = vsel %vm498, %v1403, %v1405
        %v1407 = vsel %vm330, %v1404, 0
        %v1409 = vsel %vm330, %v1406, 0
        %1411 = vmatprep.subr.mxu0 0.0
        %1412 = vmatpush1.msra.mxu0 0.0
        %1413 = vmatprep.subr.mxu0 0.0
        %1414 = vmatpush1.msra.mxu0 0.0
        %1415 = vmatprep.subr.mxu0 0.0
        %1416 = vmatpush1.msra.mxu0 0.0
        %1417 = vmatprep.subr.mxu0 0.0
        %1418 = vmatpush1.msra.mxu0 0.0
        %1419 = vmatprep.subr.mxu0 0.0
        %1420 = vmatpush1.msra.mxu0 0.0
        %1421 = vmatprep.subr.mxu0 0.0
        %1422 = vmatpush1.msra.mxu0 0.0
        %1423 = vmatprep.subr.mxu0 0.0
        %1424 = vmatpush1.msra.mxu0 0.0
        %1425 = vmatprep.subr.mxu0 0.0
        %1426 = vmatpush1.msra.mxu0 0.0
        %1427 = vmatprep.subr.mxu0 0.0
        %1428 = vmatpush1.msra.mxu0 %v1401
        %1429 = vmatprep.subr.mxu0 0.0
        %1430 = vmatpush1.msra.mxu0 %v1400
        %1431 = vmatprep.subr.mxu0 0.0
        %1432 = vmatpush1.msra.mxu0 %v1399
        %1433 = vmatprep.subr.mxu0 0.0
        %1434 = vmatpush1.msra.mxu0 %v1398
        %1435 = vmatprep.subr.mxu0 0.0
        %1436 = vmatpush1.msra.mxu0 %v1397
        %1437 = vmatprep.subr.mxu0 0.0
        %1438 = vmatpush1.msra.mxu0 %v1396
        %1439 = vmatprep.subr.mxu0 0.0
        %1440 = vmatpush1.msra.mxu0 %v1395
        %1441 = vmatprep.subr.mxu0 0.0
        %1442 = vmatpush1.msra.mxu0 %v1394
        %1443 = vmatprep.subr.mxu0 0.0
        %1444 = vmatpush2.msra.mxu0 0.0
        %1445 = vmatprep.subr.mxu0 0.0
        %1446 = vmatpush2.msra.mxu0 0.0
        %1447 = vmatprep.subr.mxu0 0.0
        %1448 = vmatpush2.msra.mxu0 0.0
        %1449 = vmatprep.subr.mxu0 0.0
        %1450 = vmatpush2.msra.mxu0 0.0
        %1451 = vmatprep.subr.mxu0 0.0
        %1452 = vmatpush2.msra.mxu0 0.0
        %1453 = vmatprep.subr.mxu0 0.0
        %1454 = vmatpush2.msra.mxu0 0.0
        %1455 = vmatprep.subr.mxu0 0.0
        %1456 = vmatpush2.msra.mxu0 0.0
        %1457 = vmatprep.subr.mxu0 0.0
        %1458 = vmatpush2.msra.mxu0 0.0
        %1459 = vmatprep.subr.mxu0 0.0
        %1460 = vmatpush2.msra.mxu0 0.0
        %1461 = vmatprep.subr.mxu0 0.0
        %1462 = vmatpush2.msra.mxu0 0.0
        %1463 = vmatprep.subr.mxu0 0.0
        %1464 = vmatpush2.msra.mxu0 0.0
        %1465 = vmatprep.subr.mxu0 0.0
        %1466 = vmatpush2.msra.mxu0 0.0
        %1467 = vmatprep.subr.mxu0 0.0
        %1468 = vmatpush2.msra.mxu0 0.0
        %1469 = vmatprep.subr.mxu0 0.0
        %1470 = vmatpush2.msra.mxu0 0.0
        %1471 = vmatprep.subr.mxu0 0.0
        %1472 = vmatpush2.msra.mxu0 0.0
        %1473 = vmatprep.subr.mxu0 0.0
        %1474 = vmatpush2.msra.mxu0 0.0
        %1475 = vmatprep.mubr.f32.mxu0 0.0
        %1476 = vmatmul.mubr.f32.gmra.mxu0 %v1407
        %v1477 = vpop.f32.mrf.mxu0
        %v1478 = vadd.f32 0.0, %v1477
        %v1479 = vpop.f32.mrf.mxu0
        %1480 = vmatprep.mubr.f32.mxu0 0.0
        %1481 = vmatmul.mubr.f32.gmra.mxu0 %v1409
        %v1482 = vpop.f32.mrf.mxu0
        %v1483 = vadd.f32 0.0, %v1482
        %v1484 = vpop.f32.mrf.mxu0
        %1485 = vdwg.mxu0
        %v1486 = vadd.f32 %v1385, %v1478
        %v1487 = vadd.f32 %v1390, %v1483
        %s1488 = scalar_lea.vmem [#allocation3], 64
        %v1489 = vld [vmem:[%s1488] sm:$0xff]
        %v1490 = vld [vmem:[%s1488 + $0x8] sm:$0xff]
        %v1491 = vld [vmem:[%s1488 + $0x10] sm:$0xff]
        %v1492 = vld [vmem:[%s1488 + $0x18] sm:$0xff]
        %v1493 = vld [vmem:[%s1488 + $0x20] sm:$0xff]
        %v1494 = vld [vmem:[%s1488 + $0x28] sm:$0xff]
        %v1495 = vld [vmem:[%s1488 + $0x30] sm:$0xff]
        %v1496 = vld [vmem:[%s1488 + $0x38] sm:$0xff]
        %1497 = vrot.lane.b32.xlu0 %v1207, 124
        %v1498 = vpop.permute.xlu0 %1497
        %1499 = vrot.lane.b32.xlu0 %v1208, 124
        %v1500 = vpop.permute.xlu0 %1499
        %v1501 = vsel %vm330, %v1498, 0
        %v1503 = vsel %vm330, %v1500, 0
        %1505 = vmatprep.subr.mxu0 0.0
        %1506 = vmatpush1.msra.mxu0 0.0
        %1507 = vmatprep.subr.mxu0 0.0
        %1508 = vmatpush1.msra.mxu0 0.0
        %1509 = vmatprep.subr.mxu0 0.0
        %1510 = vmatpush1.msra.mxu0 0.0
        %1511 = vmatprep.subr.mxu0 0.0
        %1512 = vmatpush1.msra.mxu0 0.0
        %1513 = vmatprep.subr.mxu0 0.0
        %1514 = vmatpush1.msra.mxu0 0.0
        %1515 = vmatprep.subr.mxu0 0.0
        %1516 = vmatpush1.msra.mxu0 0.0
        %1517 = vmatprep.subr.mxu0 0.0
        %1518 = vmatpush1.msra.mxu0 0.0
        %1519 = vmatprep.subr.mxu0 0.0
        %1520 = vmatpush1.msra.mxu0 0.0
        %1521 = vmatprep.subr.mxu0 0.0
        %1522 = vmatpush1.msra.mxu0 %v1496
        %1523 = vmatprep.subr.mxu0 0.0
        %1524 = vmatpush1.msra.mxu0 %v1495
        %1525 = vmatprep.subr.mxu0 0.0
        %1526 = vmatpush1.msra.mxu0 %v1494
        %1527 = vmatprep.subr.mxu0 0.0
        %1528 = vmatpush1.msra.mxu0 %v1493
        %1529 = vmatprep.subr.mxu0 0.0
        %1530 = vmatpush1.msra.mxu0 %v1492
        %1531 = vmatprep.subr.mxu0 0.0
        %1532 = vmatpush1.msra.mxu0 %v1491
        %1533 = vmatprep.subr.mxu0 0.0
        %1534 = vmatpush1.msra.mxu0 %v1490
        %1535 = vmatprep.subr.mxu0 0.0
        %1536 = vmatpush1.msra.mxu0 %v1489
        %1537 = vmatprep.subr.mxu0 0.0
        %1538 = vmatpush2.msra.mxu0 0.0
        %1539 = vmatprep.subr.mxu0 0.0
        %1540 = vmatpush2.msra.mxu0 0.0
        %1541 = vmatprep.subr.mxu0 0.0
        %1542 = vmatpush2.msra.mxu0 0.0
        %1543 = vmatprep.subr.mxu0 0.0
        %1544 = vmatpush2.msra.mxu0 0.0
        %1545 = vmatprep.subr.mxu0 0.0
        %1546 = vmatpush2.msra.mxu0 0.0
        %1547 = vmatprep.subr.mxu0 0.0
        %1548 = vmatpush2.msra.mxu0 0.0
        %1549 = vmatprep.subr.mxu0 0.0
        %1550 = vmatpush2.msra.mxu0 0.0
        %1551 = vmatprep.subr.mxu0 0.0
        %1552 = vmatpush2.msra.mxu0 0.0
        %1553 = vmatprep.subr.mxu0 0.0
        %1554 = vmatpush2.msra.mxu0 0.0
        %1555 = vmatprep.subr.mxu0 0.0
        %1556 = vmatpush2.msra.mxu0 0.0
        %1557 = vmatprep.subr.mxu0 0.0
        %1558 = vmatpush2.msra.mxu0 0.0
        %1559 = vmatprep.subr.mxu0 0.0
        %1560 = vmatpush2.msra.mxu0 0.0
        %1561 = vmatprep.subr.mxu0 0.0
        %1562 = vmatpush2.msra.mxu0 0.0
        %1563 = vmatprep.subr.mxu0 0.0
        %1564 = vmatpush2.msra.mxu0 0.0
        %1565 = vmatprep.subr.mxu0 0.0
        %1566 = vmatpush2.msra.mxu0 0.0
        %1567 = vmatprep.subr.mxu0 0.0
        %1568 = vmatpush2.msra.mxu0 0.0
        %1569 = vmatprep.mubr.f32.mxu0 0.0
        %1570 = vmatmul.mubr.f32.gmra.mxu0 %v1501
        %v1571 = vpop.f32.mrf.mxu0
        %v1572 = vadd.f32 0.0, %v1571
        %v1573 = vpop.f32.mrf.mxu0
        %1574 = vmatprep.mubr.f32.mxu0 0.0
        %1575 = vmatmul.mubr.f32.gmra.mxu0 %v1503
        %v1576 = vpop.f32.mrf.mxu0
        %v1577 = vadd.f32 0.0, %v1576
        %v1578 = vpop.f32.mrf.mxu0
        %1579 = vdwg.mxu0
        %v1580 = vadd.f32 %v1486, %v1572
        %v1581 = vadd.f32 %v1487, %v1577
        %s1582 = scalar_lea.vmem [#allocation3], 256
        %v1583 = vld [vmem:[%s1582] sm:$0xff]
        %v1584 = vld [vmem:[%s1582 + $0x8] sm:$0xff]
        %v1585 = vld [vmem:[%s1582 + $0x10] sm:$0xff]
        %v1586 = vld [vmem:[%s1582 + $0x18] sm:$0xff]
        %v1587 = vld [vmem:[%s1582 + $0x20] sm:$0xff]
        %v1588 = vld [vmem:[%s1582 + $0x28] sm:$0xff]
        %v1589 = vld [vmem:[%s1582 + $0x30] sm:$0xff]
        %v1590 = vld [vmem:[%s1582 + $0x38] sm:$0xff]
        %1591 = vrot.lane.b32.xlu0 %v1232, 124
        %v1592 = vpop.permute.xlu0 %1591
        %1593 = vrot.lane.b32.xlu0 %v1234, 124
        %v1594 = vpop.permute.xlu0 %1593
        %v1595 = vsel %vm330, %v1592, 0
        %v1597 = vsel %vm330, %v1594, 0
        %1599 = vmatprep.subr.mxu0 0.0
        %1600 = vmatpush1.msra.mxu0 0.0
        %1601 = vmatprep.subr.mxu0 0.0
        %1602 = vmatpush1.msra.mxu0 0.0
        %1603 = vmatprep.subr.mxu0 0.0
        %1604 = vmatpush1.msra.mxu0 0.0
        %1605 = vmatprep.subr.mxu0 0.0
        %1606 = vmatpush1.msra.mxu0 0.0
        %1607 = vmatprep.subr.mxu0 0.0
        %1608 = vmatpush1.msra.mxu0 0.0
        %1609 = vmatprep.subr.mxu0 0.0
        %1610 = vmatpush1.msra.mxu0 0.0
        %1611 = vmatprep.subr.mxu0 0.0
        %1612 = vmatpush1.msra.mxu0 0.0
        %1613 = vmatprep.subr.mxu0 0.0
        %1614 = vmatpush1.msra.mxu0 0.0
        %1615 = vmatprep.subr.mxu0 0.0
        %1616 = vmatpush1.msra.mxu0 %v1590
        %1617 = vmatprep.subr.mxu0 0.0
        %1618 = vmatpush1.msra.mxu0 %v1589
        %1619 = vmatprep.subr.mxu0 0.0
        %1620 = vmatpush1.msra.mxu0 %v1588
        %1621 = vmatprep.subr.mxu0 0.0
        %1622 = vmatpush1.msra.mxu0 %v1587
        %1623 = vmatprep.subr.mxu0 0.0
        %1624 = vmatpush1.msra.mxu0 %v1586
        %1625 = vmatprep.subr.mxu0 0.0
        %1626 = vmatpush1.msra.mxu0 %v1585
        %1627 = vmatprep.subr.mxu0 0.0
        %1628 = vmatpush1.msra.mxu0 %v1584
        %1629 = vmatprep.subr.mxu0 0.0
        %1630 = vmatpush1.msra.mxu0 %v1583
        %1631 = vmatprep.subr.mxu0 0.0
        %1632 = vmatpush2.msra.mxu0 0.0
        %1633 = vmatprep.subr.mxu0 0.0
        %1634 = vmatpush2.msra.mxu0 0.0
        %1635 = vmatprep.subr.mxu0 0.0
        %1636 = vmatpush2.msra.mxu0 0.0
        %1637 = vmatprep.subr.mxu0 0.0
        %1638 = vmatpush2.msra.mxu0 0.0
        %1639 = vmatprep.subr.mxu0 0.0
        %1640 = vmatpush2.msra.mxu0 0.0
        %1641 = vmatprep.subr.mxu0 0.0
        %1642 = vmatpush2.msra.mxu0 0.0
        %1643 = vmatprep.subr.mxu0 0.0
        %1644 = vmatpush2.msra.mxu0 0.0
        %1645 = vmatprep.subr.mxu0 0.0
        %1646 = vmatpush2.msra.mxu0 0.0
        %1647 = vmatprep.subr.mxu0 0.0
        %1648 = vmatpush2.msra.mxu0 0.0
        %1649 = vmatprep.subr.mxu0 0.0
        %1650 = vmatpush2.msra.mxu0 0.0
        %1651 = vmatprep.subr.mxu0 0.0
        %1652 = vmatpush2.msra.mxu0 0.0
        %1653 = vmatprep.subr.mxu0 0.0
        %1654 = vmatpush2.msra.mxu0 0.0
        %1655 = vmatprep.subr.mxu0 0.0
        %1656 = vmatpush2.msra.mxu0 0.0
        %1657 = vmatprep.subr.mxu0 0.0
        %1658 = vmatpush2.msra.mxu0 0.0
        %1659 = vmatprep.subr.mxu0 0.0
        %1660 = vmatpush2.msra.mxu0 0.0
        %1661 = vmatprep.subr.mxu0 0.0
        %1662 = vmatpush2.msra.mxu0 0.0
        %1663 = vmatprep.mubr.f32.mxu0 0.0
        %1664 = vmatmul.mubr.f32.gmra.mxu0 %v1595
        %v1665 = vpop.f32.mrf.mxu0
        %v1666 = vadd.f32 0.0, %v1665
        %v1667 = vpop.f32.mrf.mxu0
        %1668 = vmatprep.mubr.f32.mxu0 0.0
        %1669 = vmatmul.mubr.f32.gmra.mxu0 %v1597
        %v1670 = vpop.f32.mrf.mxu0
        %v1671 = vadd.f32 0.0, %v1670
        %v1672 = vpop.f32.mrf.mxu0
        %1673 = vdwg.mxu0
        %v1674 = vadd.f32 %v1580, %v1666
        %v1675 = vadd.f32 %v1581, %v1671
        %s1676 = scalar_lea.vmem [#allocation3], 448
        %v1677 = vld [vmem:[%s1676] sm:$0xff]
        %v1678 = vld [vmem:[%s1676 + $0x8] sm:$0xff]
        %v1679 = vld [vmem:[%s1676 + $0x10] sm:$0xff]
        %v1680 = vld [vmem:[%s1676 + $0x18] sm:$0xff]
        %v1681 = vld [vmem:[%s1676 + $0x20] sm:$0xff]
        %v1682 = vld [vmem:[%s1676 + $0x28] sm:$0xff]
        %v1683 = vld [vmem:[%s1676 + $0x30] sm:$0xff]
        %v1684 = vld [vmem:[%s1676 + $0x38] sm:$0xff]
        %1685 = vrot.lane.b32.xlu0 %v1404, 124
        %v1686 = vpop.permute.xlu0 %1685
        %1687 = vrot.lane.b32.xlu0 %v1406, 124
        %v1688 = vpop.permute.xlu0 %1687
        %v1689 = vsel %vm330, %v1686, 0
        %v1691 = vsel %vm330, %v1688, 0
        %1693 = vmatprep.subr.mxu0 0.0
        %1694 = vmatpush1.msra.mxu0 0.0
        %1695 = vmatprep.subr.mxu0 0.0
        %1696 = vmatpush1.msra.mxu0 0.0
        %1697 = vmatprep.subr.mxu0 0.0
        %1698 = vmatpush1.msra.mxu0 0.0
        %1699 = vmatprep.subr.mxu0 0.0
        %1700 = vmatpush1.msra.mxu0 0.0
        %1701 = vmatprep.subr.mxu0 0.0
        %1702 = vmatpush1.msra.mxu0 0.0
        %1703 = vmatprep.subr.mxu0 0.0
        %1704 = vmatpush1.msra.mxu0 0.0
        %1705 = vmatprep.subr.mxu0 0.0
        %1706 = vmatpush1.msra.mxu0 0.0
        %1707 = vmatprep.subr.mxu0 0.0
        %1708 = vmatpush1.msra.mxu0 0.0
        %1709 = vmatprep.subr.mxu0 0.0
        %1710 = vmatpush1.msra.mxu0 %v1684
        %1711 = vmatprep.subr.mxu0 0.0
        %1712 = vmatpush1.msra.mxu0 %v1683
        %1713 = vmatprep.subr.mxu0 0.0
        %1714 = vmatpush1.msra.mxu0 %v1682
        %1715 = vmatprep.subr.mxu0 0.0
        %1716 = vmatpush1.msra.mxu0 %v1681
        %1717 = vmatprep.subr.mxu0 0.0
        %1718 = vmatpush1.msra.mxu0 %v1680
        %1719 = vmatprep.subr.mxu0 0.0
        %1720 = vmatpush1.msra.mxu0 %v1679
        %1721 = vmatprep.subr.mxu0 0.0
        %1722 = vmatpush1.msra.mxu0 %v1678
        %1723 = vmatprep.subr.mxu0 0.0
        %1724 = vmatpush1.msra.mxu0 %v1677
        %1725 = vmatprep.subr.mxu0 0.0
        %1726 = vmatpush2.msra.mxu0 0.0
        %1727 = vmatprep.subr.mxu0 0.0
        %1728 = vmatpush2.msra.mxu0 0.0
        %1729 = vmatprep.subr.mxu0 0.0
        %1730 = vmatpush2.msra.mxu0 0.0
        %1731 = vmatprep.subr.mxu0 0.0
        %1732 = vmatpush2.msra.mxu0 0.0
        %1733 = vmatprep.subr.mxu0 0.0
        %1734 = vmatpush2.msra.mxu0 0.0
        %1735 = vmatprep.subr.mxu0 0.0
        %1736 = vmatpush2.msra.mxu0 0.0
        %1737 = vmatprep.subr.mxu0 0.0
        %1738 = vmatpush2.msra.mxu0 0.0
        %1739 = vmatprep.subr.mxu0 0.0
        %1740 = vmatpush2.msra.mxu0 0.0
        %1741 = vmatprep.subr.mxu0 0.0
        %1742 = vmatpush2.msra.mxu0 0.0
        %1743 = vmatprep.subr.mxu0 0.0
        %1744 = vmatpush2.msra.mxu0 0.0
        %1745 = vmatprep.subr.mxu0 0.0
        %1746 = vmatpush2.msra.mxu0 0.0
        %1747 = vmatprep.subr.mxu0 0.0
        %1748 = vmatpush2.msra.mxu0 0.0
        %1749 = vmatprep.subr.mxu0 0.0
        %1750 = vmatpush2.msra.mxu0 0.0
        %1751 = vmatprep.subr.mxu0 0.0
        %1752 = vmatpush2.msra.mxu0 0.0
        %1753 = vmatprep.subr.mxu0 0.0
        %1754 = vmatpush2.msra.mxu0 0.0
        %1755 = vmatprep.subr.mxu0 0.0
        %1756 = vmatpush2.msra.mxu0 0.0
        %1757 = vmatprep.mubr.f32.mxu0 0.0
        %1758 = vmatmul.mubr.f32.gmra.mxu0 %v1689
        %v1759 = vpop.f32.mrf.mxu0
        %v1760 = vadd.f32 0.0, %v1759
        %v1761 = vpop.f32.mrf.mxu0
        %1762 = vmatprep.mubr.f32.mxu0 0.0
        %1763 = vmatmul.mubr.f32.gmra.mxu0 %v1691
        %v1764 = vpop.f32.mrf.mxu0
        %v1765 = vadd.f32 0.0, %v1764
        %v1766 = vpop.f32.mrf.mxu0
        %1767 = vdwg.mxu0
        %v1768 = vadd.f32 %v1674, %v1760
        %v1769 = vadd.f32 %v1675, %v1765
        %s1770 = scalar_lea.vmem [#allocation3], 128
        %v1771 = vld [vmem:[%s1770] sm:$0xff]
        %v1772 = vld [vmem:[%s1770 + $0x8] sm:$0xff]
        %v1773 = vld [vmem:[%s1770 + $0x10] sm:$0xff]
        %v1774 = vld [vmem:[%s1770 + $0x18] sm:$0xff]
        %v1775 = vld [vmem:[%s1770 + $0x20] sm:$0xff]
        %v1776 = vld [vmem:[%s1770 + $0x28] sm:$0xff]
        %v1777 = vld [vmem:[%s1770 + $0x30] sm:$0xff]
        %v1778 = vld [vmem:[%s1770 + $0x38] sm:$0xff]
        %1779 = vrot.lane.b32.xlu0 %v1207, 120
        %v1780 = vpop.permute.xlu0 %1779
        %1781 = vrot.lane.b32.xlu0 %v1208, 120
        %v1782 = vpop.permute.xlu0 %1781
        %v1783 = vsel %vm330, %v1780, 0
        %v1785 = vsel %vm330, %v1782, 0
        %1787 = vmatprep.subr.mxu0 0.0
        %1788 = vmatpush1.msra.mxu0 0.0
        %1789 = vmatprep.subr.mxu0 0.0
        %1790 = vmatpush1.msra.mxu0 0.0
        %1791 = vmatprep.subr.mxu0 0.0
        %1792 = vmatpush1.msra.mxu0 0.0
        %1793 = vmatprep.subr.mxu0 0.0
        %1794 = vmatpush1.msra.mxu0 0.0
        %1795 = vmatprep.subr.mxu0 0.0
        %1796 = vmatpush1.msra.mxu0 0.0
        %1797 = vmatprep.subr.mxu0 0.0
        %1798 = vmatpush1.msra.mxu0 0.0
        %1799 = vmatprep.subr.mxu0 0.0
        %1800 = vmatpush1.msra.mxu0 0.0
        %1801 = vmatprep.subr.mxu0 0.0
        %1802 = vmatpush1.msra.mxu0 0.0
        %1803 = vmatprep.subr.mxu0 0.0
        %1804 = vmatpush1.msra.mxu0 %v1778
        %1805 = vmatprep.subr.mxu0 0.0
        %1806 = vmatpush1.msra.mxu0 %v1777
        %1807 = vmatprep.subr.mxu0 0.0
        %1808 = vmatpush1.msra.mxu0 %v1776
        %1809 = vmatprep.subr.mxu0 0.0
        %1810 = vmatpush1.msra.mxu0 %v1775
        %1811 = vmatprep.subr.mxu0 0.0
        %1812 = vmatpush1.msra.mxu0 %v1774
        %1813 = vmatprep.subr.mxu0 0.0
        %1814 = vmatpush1.msra.mxu0 %v1773
        %1815 = vmatprep.subr.mxu0 0.0
        %1816 = vmatpush1.msra.mxu0 %v1772
        %1817 = vmatprep.subr.mxu0 0.0
        %1818 = vmatpush1.msra.mxu0 %v1771
        %1819 = vmatprep.subr.mxu0 0.0
        %1820 = vmatpush2.msra.mxu0 0.0
        %1821 = vmatprep.subr.mxu0 0.0
        %1822 = vmatpush2.msra.mxu0 0.0
        %1823 = vmatprep.subr.mxu0 0.0
        %1824 = vmatpush2.msra.mxu0 0.0
        %1825 = vmatprep.subr.mxu0 0.0
        %1826 = vmatpush2.msra.mxu0 0.0
        %1827 = vmatprep.subr.mxu0 0.0
        %1828 = vmatpush2.msra.mxu0 0.0
        %1829 = vmatprep.subr.mxu0 0.0
        %1830 = vmatpush2.msra.mxu0 0.0
        %1831 = vmatprep.subr.mxu0 0.0
        %1832 = vmatpush2.msra.mxu0 0.0
        %1833 = vmatprep.subr.mxu0 0.0
        %1834 = vmatpush2.msra.mxu0 0.0
        %1835 = vmatprep.subr.mxu0 0.0
        %1836 = vmatpush2.msra.mxu0 0.0
        %1837 = vmatprep.subr.mxu0 0.0
        %1838 = vmatpush2.msra.mxu0 0.0
        %1839 = vmatprep.subr.mxu0 0.0
        %1840 = vmatpush2.msra.mxu0 0.0
        %1841 = vmatprep.subr.mxu0 0.0
        %1842 = vmatpush2.msra.mxu0 0.0
        %1843 = vmatprep.subr.mxu0 0.0
        %1844 = vmatpush2.msra.mxu0 0.0
        %1845 = vmatprep.subr.mxu0 0.0
        %1846 = vmatpush2.msra.mxu0 0.0
        %1847 = vmatprep.subr.mxu0 0.0
        %1848 = vmatpush2.msra.mxu0 0.0
        %1849 = vmatprep.subr.mxu0 0.0
        %1850 = vmatpush2.msra.mxu0 0.0
        %1851 = vmatprep.mubr.f32.mxu0 0.0
        %1852 = vmatmul.mubr.f32.gmra.mxu0 %v1783
        %v1853 = vpop.f32.mrf.mxu0
        %v1854 = vadd.f32 0.0, %v1853
        %v1855 = vpop.f32.mrf.mxu0
        %1856 = vmatprep.mubr.f32.mxu0 0.0
        %1857 = vmatmul.mubr.f32.gmra.mxu0 %v1785
        %v1858 = vpop.f32.mrf.mxu0
        %v1859 = vadd.f32 0.0, %v1858
        %v1860 = vpop.f32.mrf.mxu0
        %1861 = vdwg.mxu0
        %v1862 = vadd.f32 %v1768, %v1854
        %v1863 = vadd.f32 %v1769, %v1859
        %s1864 = scalar_lea.vmem [#allocation3], 320
        %v1865 = vld [vmem:[%s1864] sm:$0xff]
        %v1866 = vld [vmem:[%s1864 + $0x8] sm:$0xff]
        %v1867 = vld [vmem:[%s1864 + $0x10] sm:$0xff]
        %v1868 = vld [vmem:[%s1864 + $0x18] sm:$0xff]
        %v1869 = vld [vmem:[%s1864 + $0x20] sm:$0xff]
        %v1870 = vld [vmem:[%s1864 + $0x28] sm:$0xff]
        %v1871 = vld [vmem:[%s1864 + $0x30] sm:$0xff]
        %v1872 = vld [vmem:[%s1864 + $0x38] sm:$0xff]
        %1873 = vrot.lane.b32.xlu0 %v1232, 120
        %v1874 = vpop.permute.xlu0 %1873
        %1875 = vrot.lane.b32.xlu0 %v1234, 120
        %v1876 = vpop.permute.xlu0 %1875
        %v1877 = vsel %vm330, %v1874, 0
        %v1879 = vsel %vm330, %v1876, 0
        %1881 = vmatprep.subr.mxu0 0.0
        %1882 = vmatpush1.msra.mxu0 0.0
        %1883 = vmatprep.subr.mxu0 0.0
        %1884 = vmatpush1.msra.mxu0 0.0
        %1885 = vmatprep.subr.mxu0 0.0
        %1886 = vmatpush1.msra.mxu0 0.0
        %1887 = vmatprep.subr.mxu0 0.0
        %1888 = vmatpush1.msra.mxu0 0.0
        %1889 = vmatprep.subr.mxu0 0.0
        %1890 = vmatpush1.msra.mxu0 0.0
        %1891 = vmatprep.subr.mxu0 0.0
        %1892 = vmatpush1.msra.mxu0 0.0
        %1893 = vmatprep.subr.mxu0 0.0
        %1894 = vmatpush1.msra.mxu0 0.0
        %1895 = vmatprep.subr.mxu0 0.0
        %1896 = vmatpush1.msra.mxu0 0.0
        %1897 = vmatprep.subr.mxu0 0.0
        %1898 = vmatpush1.msra.mxu0 %v1872
        %1899 = vmatprep.subr.mxu0 0.0
        %1900 = vmatpush1.msra.mxu0 %v1871
        %1901 = vmatprep.subr.mxu0 0.0
        %1902 = vmatpush1.msra.mxu0 %v1870
        %1903 = vmatprep.subr.mxu0 0.0
        %1904 = vmatpush1.msra.mxu0 %v1869
        %1905 = vmatprep.subr.mxu0 0.0
        %1906 = vmatpush1.msra.mxu0 %v1868
        %1907 = vmatprep.subr.mxu0 0.0
        %1908 = vmatpush1.msra.mxu0 %v1867
        %1909 = vmatprep.subr.mxu0 0.0
        %1910 = vmatpush1.msra.mxu0 %v1866
        %1911 = vmatprep.subr.mxu0 0.0
        %1912 = vmatpush1.msra.mxu0 %v1865
        %1913 = vmatprep.subr.mxu0 0.0
        %1914 = vmatpush2.msra.mxu0 0.0
        %1915 = vmatprep.subr.mxu0 0.0
        %1916 = vmatpush2.msra.mxu0 0.0
        %1917 = vmatprep.subr.mxu0 0.0
        %1918 = vmatpush2.msra.mxu0 0.0
        %1919 = vmatprep.subr.mxu0 0.0
        %1920 = vmatpush2.msra.mxu0 0.0
        %1921 = vmatprep.subr.mxu0 0.0
        %1922 = vmatpush2.msra.mxu0 0.0
        %1923 = vmatprep.subr.mxu0 0.0
        %1924 = vmatpush2.msra.mxu0 0.0
        %1925 = vmatprep.subr.mxu0 0.0
        %1926 = vmatpush2.msra.mxu0 0.0
        %1927 = vmatprep.subr.mxu0 0.0
        %1928 = vmatpush2.msra.mxu0 0.0
        %1929 = vmatprep.subr.mxu0 0.0
        %1930 = vmatpush2.msra.mxu0 0.0
        %1931 = vmatprep.subr.mxu0 0.0
        %1932 = vmatpush2.msra.mxu0 0.0
        %1933 = vmatprep.subr.mxu0 0.0
        %1934 = vmatpush2.msra.mxu0 0.0
        %1935 = vmatprep.subr.mxu0 0.0
        %1936 = vmatpush2.msra.mxu0 0.0
        %1937 = vmatprep.subr.mxu0 0.0
        %1938 = vmatpush2.msra.mxu0 0.0
        %1939 = vmatprep.subr.mxu0 0.0
        %1940 = vmatpush2.msra.mxu0 0.0
        %1941 = vmatprep.subr.mxu0 0.0
        %1942 = vmatpush2.msra.mxu0 0.0
        %1943 = vmatprep.subr.mxu0 0.0
        %1944 = vmatpush2.msra.mxu0 0.0
        %1945 = vmatprep.mubr.f32.mxu0 0.0
        %1946 = vmatmul.mubr.f32.gmra.mxu0 %v1877
        %v1947 = vpop.f32.mrf.mxu0
        %v1948 = vadd.f32 0.0, %v1947
        %v1949 = vpop.f32.mrf.mxu0
        %1950 = vmatprep.mubr.f32.mxu0 0.0
        %1951 = vmatmul.mubr.f32.gmra.mxu0 %v1879
        %v1952 = vpop.f32.mrf.mxu0
        %v1953 = vadd.f32 0.0, %v1952
        %v1954 = vpop.f32.mrf.mxu0
        %1955 = vdwg.mxu0
        %v1956 = vadd.f32 %v1862, %v1948
        %v1957 = vadd.f32 %v1863, %v1953
        %s1958 = scalar_lea.vmem [#allocation3], 512
        %v1959 = vld [vmem:[%s1958] sm:$0xff]
        %v1960 = vld [vmem:[%s1958 + $0x8] sm:$0xff]
        %v1961 = vld [vmem:[%s1958 + $0x10] sm:$0xff]
        %v1962 = vld [vmem:[%s1958 + $0x18] sm:$0xff]
        %v1963 = vld [vmem:[%s1958 + $0x20] sm:$0xff]
        %v1964 = vld [vmem:[%s1958 + $0x28] sm:$0xff]
        %v1965 = vld [vmem:[%s1958 + $0x30] sm:$0xff]
        %v1966 = vld [vmem:[%s1958 + $0x38] sm:$0xff]
        %1967 = vrot.lane.b32.xlu0 %v1404, 120
        %v1968 = vpop.permute.xlu0 %1967
        %1969 = vrot.lane.b32.xlu0 %v1406, 120
        %v1970 = vpop.permute.xlu0 %1969
        %v1971 = vsel %vm330, %v1968, 0
        %v1973 = vsel %vm330, %v1970, 0
        %1975 = vmatprep.subr.mxu0 0.0
        %1976 = vmatpush1.msra.mxu0 0.0
        %1977 = vmatprep.subr.mxu0 0.0
        %1978 = vmatpush1.msra.mxu0 0.0
        %1979 = vmatprep.subr.mxu0 0.0
        %1980 = vmatpush1.msra.mxu0 0.0
        %1981 = vmatprep.subr.mxu0 0.0
        %1982 = vmatpush1.msra.mxu0 0.0
        %1983 = vmatprep.subr.mxu0 0.0
        %1984 = vmatpush1.msra.mxu0 0.0
        %1985 = vmatprep.subr.mxu0 0.0
        %1986 = vmatpush1.msra.mxu0 0.0
        %1987 = vmatprep.subr.mxu0 0.0
        %1988 = vmatpush1.msra.mxu0 0.0
        %1989 = vmatprep.subr.mxu0 0.0
        %1990 = vmatpush1.msra.mxu0 0.0
        %1991 = vmatprep.subr.mxu0 0.0
        %1992 = vmatpush1.msra.mxu0 %v1966
        %1993 = vmatprep.subr.mxu0 0.0
        %1994 = vmatpush1.msra.mxu0 %v1965
        %1995 = vmatprep.subr.mxu0 0.0
        %1996 = vmatpush1.msra.mxu0 %v1964
        %1997 = vmatprep.subr.mxu0 0.0
        %1998 = vmatpush1.msra.mxu0 %v1963
        %1999 = vmatprep.subr.mxu0 0.0
        %2000 = vmatpush1.msra.mxu0 %v1962
        %2001 = vmatprep.subr.mxu0 0.0
        %2002 = vmatpush1.msra.mxu0 %v1961
        %2003 = vmatprep.subr.mxu0 0.0
        %2004 = vmatpush1.msra.mxu0 %v1960
        %2005 = vmatprep.subr.mxu0 0.0
        %2006 = vmatpush1.msra.mxu0 %v1959
        %2007 = vmatprep.subr.mxu0 0.0
        %2008 = vmatpush2.msra.mxu0 0.0
        %2009 = vmatprep.subr.mxu0 0.0
        %2010 = vmatpush2.msra.mxu0 0.0
        %2011 = vmatprep.subr.mxu0 0.0
        %2012 = vmatpush2.msra.mxu0 0.0
        %2013 = vmatprep.subr.mxu0 0.0
        %2014 = vmatpush2.msra.mxu0 0.0
        %2015 = vmatprep.subr.mxu0 0.0
        %2016 = vmatpush2.msra.mxu0 0.0
        %2017 = vmatprep.subr.mxu0 0.0
        %2018 = vmatpush2.msra.mxu0 0.0
        %2019 = vmatprep.subr.mxu0 0.0
        %2020 = vmatpush2.msra.mxu0 0.0
        %2021 = vmatprep.subr.mxu0 0.0
        %2022 = vmatpush2.msra.mxu0 0.0
        %2023 = vmatprep.subr.mxu0 0.0
        %2024 = vmatpush2.msra.mxu0 0.0
        %2025 = vmatprep.subr.mxu0 0.0
        %2026 = vmatpush2.msra.mxu0 0.0
        %2027 = vmatprep.subr.mxu0 0.0
        %2028 = vmatpush2.msra.mxu0 0.0
        %2029 = vmatprep.subr.mxu0 0.0
        %2030 = vmatpush2.msra.mxu0 0.0
        %2031 = vmatprep.subr.mxu0 0.0
        %2032 = vmatpush2.msra.mxu0 0.0
        %2033 = vmatprep.subr.mxu0 0.0
        %2034 = vmatpush2.msra.mxu0 0.0
        %2035 = vmatprep.subr.mxu0 0.0
        %2036 = vmatpush2.msra.mxu0 0.0
        %2037 = vmatprep.subr.mxu0 0.0
        %2038 = vmatpush2.msra.mxu0 0.0
        %2039 = vmatprep.mubr.f32.mxu0 0.0
        %2040 = vmatmul.mubr.f32.gmra.mxu0 %v1971
        %v2041 = vpop.f32.mrf.mxu0
        %v2042 = vadd.f32 0.0, %v2041
        %v2043 = vpop.f32.mrf.mxu0
        %2044 = vmatprep.mubr.f32.mxu0 0.0
        %2045 = vmatmul.mubr.f32.gmra.mxu0 %v1973
        %v2046 = vpop.f32.mrf.mxu0
        %v2047 = vadd.f32 0.0, %v2046
        %v2048 = vpop.f32.mrf.mxu0
        %2049 = vdwg.mxu0
        %v2050 = vadd.f32 %v1956, %v2042
        %v2051 = vadd.f32 %v1957, %v2047
        %v2052 = vld [vmem:[%s5] sm:$0x1]
        %v2054 = vlaneseq
        %v2055 = vshrl.u32 %v2054, 7
        %v2056 = vsub.s32 0, %v2055
        %v2057 = vrot.slane %v2052, %v2056
        %v2059 = vadd.f32 %v2050, %v2057
        %v2060 = vadd.f32 %v2051, %v2057
        %v2061 = vadd.f32 %v2059, %v272
        %v2062 = vadd.f32 %v2060, %v273
        %2063 = vst.msk [vmem:[%s266] sm:$0xff] %vm330, %v2061
        %2064 = vst.msk [vmem:[%s266 + $0x8] sm:$0xff] %vm330, %v2062
        %p2065 = scmp.lt.s32.totalorder %s18, 1
        %s2066 = scalar_select %p2065, %s18, 1
        %s2067 = smul.addr %s2066, 2
        %s2068 = smul.addr %s2067, 8
        %s2069 = scalar_lea.vmem %s6, %s2068
        // Predicated region
        $region49: #{residual_block_forward.1} parent=43 // pred_check
          %p2070 = pneg %p167
        $region50: #{residual_block_forward.1} parent=43 // pred_check_branch
          %2072 = sbr.rel (%p2070) target = $region52
        $region51: #{residual_block_forward.1} parent=43 // pred_region
          _
        $region52: #{residual_block_forward.1} parent=43 // pred_fallthru
          _
      $region44: #{residual_block_forward.1} parent=5 // pred_fallthru
        _
      %p2073 = scmp.le.s32.totalorder 2, %s13
      // Predicated region
      $region53: #{residual_block_forward.1} parent=5 // pred_check
        %p2074 = pneg %p2073
      $region54: #{residual_block_forward.1} parent=5 // pred_check_branch
        %2076 = sbr.rel (%p2074) target = $region56
      $region55: #{residual_block_forward.1} parent=5 // pred_region
        %s2077 = ssub.s32 %s13, 2
        // Predicated region
        $region57: #{residual_block_forward.1} parent=55 // pred_check
          %p2078 = pneg %p173
        $region58: #{residual_block_forward.1} parent=55 // pred_check_branch
          %2080 = sbr.rel (%p2078) target = $region60
        $region59: #{residual_block_forward.1} parent=55 // pred_region
          %p2081 = scmp.lt.s32.totalorder %s19, 1
          %s2082 = scalar_select %p2081, %s19, 1
          %s2083 = smul.addr %s2082, 2
          %s2084 = smul.addr %s2083, 8
          %s2085 = scalar_lea.vmem %s6, %s2084
        $region60: #{residual_block_forward.1} parent=55 // pred_fallthru
          _
      $region56: #{residual_block_forward.1} parent=5 // pred_fallthru
        _
    $region6: #{residual_block_forward.1} parent=1 // loop_footer
      %s17 = sadd.s32 1, %s13
    $region7: #{residual_block_forward.1} parent=1 // loop_footer_branch
      %12 = sbr.rel target = $region3
    $region8: #{residual_block_forward.1} parent=1 // loop_exit
      _
    %2086 = vsyncpa [#allocation4], 1
    %s2087 = scalar_lea.sflag [#allocation4], 1
    %2088 = vsyncpa %s2087, 1

</llo_original>
